<compile_context>
chip_gen: v7x
topology: tpu7x:2x2x1
jax: 0.10.0
libtpu: 0.0.40
codegen_flags: <defaults>
</compile_context>

<pallas_src>
import functools

import jax
import jax.numpy as jnp
from jax.experimental import pallas as pl
from jax.experimental.pallas import tpu as pltpu


def _round_up(n, m):
    return (n + m - 1) // m * m


def _mlp_tail(z1, b1, w2_bf16, b2, w3, b3_scalar):
    """Layers 2/3 on a (H, TE) layer-1 pre-activation block (f32 in/out)."""
    h = jnp.maximum(z1 + b1, 0.0)                                       # (H, TE) f32
    h2 = jnp.dot(w2_bf16, h.astype(jnp.bfloat16),
                 preferred_element_type=jnp.float32) + b2               # (32, TE) f32
    h2 = jnp.maximum(h2, 0.0)
    # Layer 3 (32 -> 1): VPU multiply + sublane (XLU) reduce, already lane-dense.
    return jnp.sum(h2 * w3, axis=0, keepdims=True) + b3_scalar          # (1, TE) f32


def _fused_gather_kernel(src_ref, dst_ref, e_ref, wxs_ref, wxd_ref, w1e_ref,
                         b1_ref, w2_ref, b2_ref, w3_ref, b3_ref, out_ref):
    """One edge tile; the per-edge gather is fused into layer 1.

    src_ref/dst_ref : (1, TE) int32        endpoint ids (lane-resident)
    e_ref           : (TE, edge_dim) f32   edge features, natural layout
    wxs_ref/wxd_ref : (H, NN) bf16         W1[:, :nd] @ x^T  /  W1[:, nd:2nd] @ x^T
    w1e_ref         : (H, edge_dim) bf16
    b1_ref          : (H, 1) f32
    w2_ref, b2_ref  : (32, H) bf16, (32, 1) f32
    w3_ref          : (32, 1) f32
    b3_ref          : (1, 1) f32 scalar in SMEM
    out_ref         : (1, TE) f32          lane-dense scores
    """
    nn = wxs_ref.shape[1]
    node_ids = jax.lax.broadcasted_iota(jnp.int32, (nn, 1), 0)          # (NN, 1)

    # Gather + layer-1 node contribution in ONE MXU dot per endpoint, src then
    # dst, so only one (NN, TE) one-hot is live at a time (bounds VMEM/vregs).
    oh = jnp.where(node_ids == src_ref[...], 1.0, 0.0).astype(jnp.bfloat16)
    z1 = jnp.dot(wxs_ref[...], oh, preferred_element_type=jnp.float32)   # (H, TE)
    oh = jnp.where(node_ids == dst_ref[...], 1.0, 0.0).astype(jnp.bfloat16)
    z1 = z1 + jnp.dot(wxd_ref[...], oh, preferred_element_type=jnp.float32)

    # Edge-feature contribution: contract on the last axis of both operands
    # (A @ B^T / trans_b form) so e streams in its natural [TE, edge_dim] layout.
    z1 = z1 + jax.lax.dot_general(
        w1e_ref[...], e_ref[...].astype(jnp.bfloat16),
        (((1,), (1,)), ((), ())), preferred_element_type=jnp.float32)

    out_ref[...] = _mlp_tail(z1, b1_ref[...], w2_ref[...], b2_ref[...],
                             w3_ref[...], b3_ref[0, 0]).astype(out_ref.dtype)


def _pregather_kernel(xs_ref, xd_ref, e_ref, w1s_ref, w1d_ref, w1e_ref,
                      b1_ref, w2_ref, b2_ref, w3_ref, b3_ref, out_ref):
    """One edge tile; x[src] / x[dst] were gathered by XLA and are streamed.

    xs_ref/xd_ref : (TE, node_dim) bf16    gathered node features, natural layout
    e_ref         : (TE, edge_dim) f32
    w1s/w1d/w1e   : (H, node_dim)/(H, node_dim)/(H, edge_dim) bf16
    remaining args as in _fused_gather_kernel.
    """
    dn = (((1,), (1,)), ((), ()))   # contract last dim of both operands (A @ B^T)
    z1 = jax.lax.dot_general(w1s_ref[...], xs_ref[...], dn,
                             preferred_element_type=jnp.float32)         # (H, TE)
    z1 = z1 + jax.lax.dot_general(w1d_ref[...], xd_ref[...], dn,
                                  preferred_element_type=jnp.float32)
    z1 = z1 + jax.lax.dot_general(w1e_ref[...], e_ref[...].astype(jnp.bfloat16),
                                  dn, preferred_element_type=jnp.float32)

    out_ref[...] = _mlp_tail(z1, b1_ref[...], w2_ref[...], b2_ref[...],
                             w3_ref[...], b3_ref[0, 0]).astype(out_ref.dtype)


@functools.partial(jax.jit, static_argnames=("tile_e", "gather_mode"))
def score_predictor_forward(x, e, src_idx, dst_idx, params, *,
                            tile_e=8192, gather_mode="auto"):
    """x: [N, node_dim], e: [E, edge_dim], src/dst: [E] int.  Returns [E, 1]."""
    w1, b1, w2, b2, w3, b3 = params            # nn.Linear layout: (out, in), (out,)
    num_nodes, node_dim = x.shape
    E, edge_dim = e.shape
    H = w1.shape[0]
    h2_dim = w2.shape[0]
    F = 2 * node_dim + edge_dim
    assert w1.shape == (H, F)
    assert w3.shape == (1, h2_dim)

    # --- edge tiling: big tiles amortize the ~0.35us/step overhead; clamp for
    # tiny graphs and keep >= 2 grid steps so both v7x TensorCores get work.
    tile_e = _round_up(max(int(tile_e), 128), 128)
    tile_e = min(tile_e, _round_up(E, 128))
    if E > 128 and pl.cdiv(E, tile_e) < 2:
        tile_e = _round_up(pl.cdiv(E, 2), 128)
    num_tiles = pl.cdiv(E, tile_e)

    # --- gather-strategy selection (in-kernel one-hot is O(num_nodes)/edge and
    # needs an (NN, tile_e) bf16 one-hot in VMEM -> gate it).
    if gather_mode == "auto":
        gather_mode = "fused" if num_nodes * tile_e <= 2 * 1024 * 1024 else "pregather"
    if gather_mode not in ("fused", "pregather"):
        raise ValueError(f"unknown gather_mode {gather_mode!r}")

    # --- operands: bf16 at every MXU input, f32 biases / layer-3 weights.
    x_f32 = x.astype(jnp.float32)
    e_f32 = e.astype(jnp.float32)
    src_i = src_idx.astype(jnp.int32).reshape(1, E)
    dst_i = dst_idx.astype(jnp.int32).reshape(1, E)

    w1_f32 = w1.astype(jnp.float32)
    w1s = w1_f32[:, :node_dim]
    w1d = w1_f32[:, node_dim:2 * node_dim]
    w1e_bf = w1_f32[:, 2 * node_dim:].astype(jnp.bfloat16)
    b1c = b1.astype(jnp.float32).reshape(H, 1)
    w2_bf = w2.astype(jnp.bfloat16)
    b2c = b2.astype(jnp.float32).reshape(h2_dim, 1)
    w3c = w3.astype(jnp.float32).reshape(h2_dim, 1)
    b3c = b3.astype(jnp.float32).reshape(1, 1)

    edge_row_blk = lambda i: (i, 0)    # stream [E, d] row blocks
    edge_lane_blk = lambda i: (0, i)   # stream (1, E) lane blocks
    full = lambda i: (0, 0)            # resident operands: one block total

    common_specs = [
        pl.BlockSpec((H, edge_dim), full),                  # W1 edge cols (bf16)
        pl.BlockSpec((H, 1), full),                         # b1
        pl.BlockSpec((h2_dim, H), full),                    # W2 (bf16)
        pl.BlockSpec((h2_dim, 1), full),                    # b2
        pl.BlockSpec((h2_dim, 1), full),                    # W3 column
        pl.BlockSpec(memory_space=pltpu.MemorySpace.SMEM),  # b3 scalar
    ]
    common_args = (w1e_bf, b1c, w2_bf, b2c, w3c, b3c)
    out_spec = pl.BlockSpec((1, tile_e), edge_lane_blk)     # lane-dense scores
    cparams = pltpu.CompilerParams(
        dimension_semantics=("parallel",),
        vmem_limit_bytes=48 * 1024 * 1024)

    if gather_mode == "fused":
        # Pre-apply W1's src/dst column slices to the node table once:
        #   W1[:, :nd] @ x[src]^T == (W1[:, :nd] @ x^T)[:, src]
        # so the in-kernel one-hot gather directly yields layer-1 partial sums.
        wxs = jnp.dot(w1s, x_f32.T).astype(jnp.bfloat16)     # (H, NN)
        wxd = jnp.dot(w1d, x_f32.T).astype(jnp.bfloat16)

        flops = int(E) * int(4 * H * num_nodes + 2 * H * edge_dim
                             + 2 * h2_dim * H + 3 * h2_dim)
        bytes_accessed = int(4 * E * (edge_dim + 3)
                             + 2 * (wxs.size + wxd.size + w1e_bf.size + w2_bf.size)
                             + 4 * (H + 2 * h2_dim + 1))

        out = pl.pallas_call(
            _fused_gather_kernel,
            out_shape=jax.ShapeDtypeStruct((1, E), jnp.float32),
            grid=(num_tiles,),
            in_specs=[
                pl.BlockSpec((1, tile_e), edge_lane_blk),         # src ids
                pl.BlockSpec((1, tile_e), edge_lane_blk),         # dst ids
                pl.BlockSpec((tile_e, edge_dim), edge_row_blk),   # e row block
                pl.BlockSpec((H, num_nodes), full),               # W1s @ x^T (resident)
                pl.BlockSpec((H, num_nodes), full),               # W1d @ x^T (resident)
                *common_specs,
            ],
            out_specs=out_spec,
            compiler_params=cparams,
            cost_estimate=pl.CostEstimate(flops=flops, transcendentals=0,
                                          bytes_accessed=bytes_accessed),
        )(src_i, dst_i, e_f32, wxs, wxd, *common_args)
    else:
        # Real gather (O(node_dim) per edge, flat VMEM): materialize x[src] /
        # x[dst] with XLA and stream them as natural bf16 row blocks.
        xs = jnp.take(x_f32, src_i[0], axis=0).astype(jnp.bfloat16)   # (E, nd)
        xd = jnp.take(x_f32, dst_i[0], axis=0).astype(jnp.bfloat16)
        w1s_bf = w1s.astype(jnp.bfloat16)
        w1d_bf = w1d.astype(jnp.bfloat16)

        flops = int(E) * int(2 * H * F + 2 * h2_dim * H + 3 * h2_dim)
        bytes_accessed = int(E * (4 * edge_dim + 2 * 2 * node_dim + 4)
                             + 2 * (w1.size + w2_bf.size) + 4 * (H + 2 * h2_dim + 1))

        out = pl.pallas_call(
            _pregather_kernel,
            out_shape=jax.ShapeDtypeStruct((1, E), jnp.float32),
            grid=(num_tiles,),
            in_specs=[
                pl.BlockSpec((tile_e, node_dim), edge_row_blk),   # x[src] (bf16)
                pl.BlockSpec((tile_e, node_dim), edge_row_blk),   # x[dst] (bf16)
                pl.BlockSpec((tile_e, edge_dim), edge_row_blk),   # e
                pl.BlockSpec((H, node_dim), full),                # W1 src cols
                pl.BlockSpec((H, node_dim), full),                # W1 dst cols
                *common_specs,
            ],
            out_specs=out_spec,
            compiler_params=cparams,
            cost_estimate=pl.CostEstimate(flops=flops, transcendentals=0,
                                          bytes_accessed=bytes_accessed),
        )(xs, xd, e_f32, w1s_bf, w1d_bf, *common_args)

    return out.reshape(E, 1)


def init_params(key, in_features, hidden_edge_scores, dtype=jnp.float32):
    """nn.Linear-style init; weights kept in PyTorch (out, in) layout."""
    ks = jax.random.split(key, 6)

    def linear(kw, kb, fan_in, fan_out):
        bound = 1.0 / jnp.sqrt(fan_in)
        w = jax.random.uniform(kw, (fan_out, fan_in), dtype, -bound, bound)
        b = jax.random.uniform(kb, (fan_out,), dtype, -bound, bound)
        return w, b

    w1, b1 = linear(ks[0], ks[1], in_features, hidden_edge_scores)
    w2, b2 = linear(ks[2], ks[3], hidden_edge_scores, 32)
    w3, b3 = linear(ks[4], ks[5], 32, 1)
    return (w1, b1, w2, b2, w3, b3)


def reference_forward(x, e, src_idx, dst_idx, params):
    """Pure-JAX f32 reference matching the PyTorch module semantics."""
    w1, b1, w2, b2, w3, b3 = params
    data = jnp.concatenate([x[src_idx], x[dst_idx], e], axis=1)
    h = jnp.maximum(data @ w1.T + b1, 0.0)
    h = jnp.maximum(h @ w2.T + b2, 0.0)
    return h @ w3.T + b3


if __name__ == "__main__":
    key = jax.random.PRNGKey(0)
    k_x, k_e, k_src, k_dst, k_p = jax.random.split(key, 5)

    # Small synthetic graph (non-multiple-of-128 edge count exercises the
    # masked last tile; small node count exercises the fused-gather path).
    num_nodes = 24
    node_dim = 16
    edge_dim = 16
    num_edges = 2000
    hidden_edge_scores = 32
    in_features = 2 * node_dim + edge_dim        # concat(src, dst, e) -> 48

    x = jax.random.normal(k_x, (num_nodes, node_dim), jnp.float32)
    e = jax.random.normal(k_e, (num_edges, edge_dim), jnp.float32)
    src_idx = jax.random.randint(k_src, (num_edges,), 0, num_nodes)
    dst_idx = jax.random.randint(k_dst, (num_edges,), 0, num_nodes)
    params = init_params(k_p, in_features, hidden_edge_scores)

    ref = reference_forward(x, e, src_idx, dst_idx, params)

    # Path 1: fused in-kernel gather (auto-selected for a small node table).
    # tile_e=1024 keeps the demo small while still giving a 2-step grid.
    score = score_predictor_forward(x, e, src_idx, dst_idx, params, tile_e=1024)
    score = jax.block_until_ready(score)
    assert score.shape == (num_edges, 1)
    assert jnp.allclose(score, ref, atol=5e-2, rtol=5e-2), (
        "fused-gather mismatch, max abs err "
        f"{float(jnp.max(jnp.abs(score - ref))):.3e}")

    # Path 2: pre-gathered streaming path (used automatically for large graphs).
    score2 = score_predictor_forward(x, e, src_idx, dst_idx, params,
                                     tile_e=1024, gather_mode="pregather")
    score2 = jax.block_until_ready(score2)
    assert score2.shape == (num_edges, 1)
    assert jnp.allclose(score2, ref, atol=5e-2, rtol=5e-2), (
        "pregather mismatch, max abs err "
        f"{float(jnp.max(jnp.abs(score2 - ref))):.3e}")

    print("KERNEL_OK")
</pallas_src>

<mosaic_0001>
module attributes {stable_mosaic.version = 11 : i64} {
  func.func @_fused_gather_kernel(%arg0: i32, %arg1: memref<1x1024xi32, #tpu.memory_space<vmem>>, %arg2: memref<1x1024xi32, #tpu.memory_space<vmem>>, %arg3: memref<1024x16xf32, #tpu.memory_space<vmem>>, %arg4: memref<32x24xbf16, #tpu.memory_space<vmem>>, %arg5: memref<32x24xbf16, #tpu.memory_space<vmem>>, %arg6: memref<32x16xbf16, #tpu.memory_space<vmem>>, %arg7: memref<32x1xf32, #tpu.memory_space<vmem>>, %arg8: memref<32x32xbf16, #tpu.memory_space<vmem>>, %arg9: memref<32x1xf32, #tpu.memory_space<vmem>>, %arg10: memref<32x1xf32, #tpu.memory_space<vmem>>, %arg11: memref<1x1xf32, #tpu.memory_space<smem>>, %arg12: memref<1x1024xf32, #tpu.memory_space<vmem>>) attributes {dimension_semantics = [#tpu.dimension_semantics<parallel>], iteration_bounds = array<i64: 2>, scalar_prefetch = 0 : i64, scratch_operands = 0 : i64, tpu.core_type = #tpu.core_type<tc>, window_params = [{transform_indices = @transform_0, window_bounds = array<i64: 1, 1024>}, {transform_indices = @transform_1, window_bounds = array<i64: 1, 1024>}, {transform_indices = @transform_2, window_bounds = array<i64: 1024, 16>}, {pipeline_mode = #tpu.pipeline_mode<synchronous>, transform_indices = @transform_3, window_bounds = array<i64: 32, 24>}, {pipeline_mode = #tpu.pipeline_mode<synchronous>, transform_indices = @transform_4, window_bounds = array<i64: 32, 24>}, {pipeline_mode = #tpu.pipeline_mode<synchronous>, transform_indices = @transform_5, window_bounds = array<i64: 32, 16>}, {pipeline_mode = #tpu.pipeline_mode<synchronous>, transform_indices = @transform_6, window_bounds = array<i64: 32, 1>}, {pipeline_mode = #tpu.pipeline_mode<synchronous>, transform_indices = @transform_7, window_bounds = array<i64: 32, 32>}, {pipeline_mode = #tpu.pipeline_mode<synchronous>, transform_indices = @transform_8, window_bounds = array<i64: 32, 1>}, {pipeline_mode = #tpu.pipeline_mode<synchronous>, transform_indices = @transform_9, window_bounds = array<i64: 32, 1>}, {transform_indices = @transform_10, window_bounds = array<i64: 1, 1>}, {transform_indices = @transform_11, window_bounds = array<i64: 1, 1024>}]} {
    %0 = tpu.iota {dimensions = array<i32: 0>} : vector<24x1xi32>
    %c0 = arith.constant 0 : index
    %c0_0 = arith.constant 0 : index
    %1 = vector.load %arg1[%c0, %c0_0] : memref<1x1024xi32, #tpu.memory_space<vmem>>, vector<1x1024xi32>
    %2 = vector.broadcast %0 : vector<24x1xi32> to vector<24x1024xi32>
    %3 = vector.broadcast %1 : vector<1x1024xi32> to vector<24x1024xi32>
    %4 = arith.cmpi eq, %2, %3 : vector<24x1024xi32>
    %cst = arith.constant 1.000000e+00 : f32
    %cst_1 = arith.constant 0.000000e+00 : f32
    %5 = vector.broadcast %cst : f32 to vector<24x1024xf32>
    %6 = vector.broadcast %cst_1 : f32 to vector<24x1024xf32>
    %7 = arith.select %4, %5, %6 : vector<24x1024xi1>, vector<24x1024xf32>
    %8 = arith.truncf %7 : vector<24x1024xf32> to vector<24x1024xbf16>
    %c0_2 = arith.constant 0 : index
    %c0_3 = arith.constant 0 : index
    %9 = vector.load %arg4[%c0_2, %c0_3] : memref<32x24xbf16, #tpu.memory_space<vmem>>, vector<32x24xbf16>
    %cst_4 = arith.constant dense<0.000000e+00> : vector<32x1024xf32>
    %10 = tpu.matmul %9, %8, %cst_4 {dimension_numbers = #tpu.dot_dimension_numbers<[1], [0], [0], [1], [0, 0, 1, 1], [], []>} : vector<32x24xbf16>, vector<24x1024xbf16>, vector<32x1024xf32> -> vector<32x1024xf32>
    %c0_5 = arith.constant 0 : index
    %c0_6 = arith.constant 0 : index
    %11 = vector.load %arg2[%c0_5, %c0_6] : memref<1x1024xi32, #tpu.memory_space<vmem>>, vector<1x1024xi32>
    %12 = vector.broadcast %0 : vector<24x1xi32> to vector<24x1024xi32>
    %13 = vector.broadcast %11 : vector<1x1024xi32> to vector<24x1024xi32>
    %14 = arith.cmpi eq, %12, %13 : vector<24x1024xi32>
    %cst_7 = arith.constant 1.000000e+00 : f32
    %cst_8 = arith.constant 0.000000e+00 : f32
    %15 = vector.broadcast %cst_7 : f32 to vector<24x1024xf32>
    %16 = vector.broadcast %cst_8 : f32 to vector<24x1024xf32>
    %17 = arith.select %14, %15, %16 : vector<24x1024xi1>, vector<24x1024xf32>
    %18 = arith.truncf %17 : vector<24x1024xf32> to vector<24x1024xbf16>
    %c0_9 = arith.constant 0 : index
    %c0_10 = arith.constant 0 : index
    %19 = vector.load %arg5[%c0_9, %c0_10] : memref<32x24xbf16, #tpu.memory_space<vmem>>, vector<32x24xbf16>
    %cst_11 = arith.constant dense<0.000000e+00> : vector<32x1024xf32>
    %20 = tpu.matmul %19, %18, %cst_11 {dimension_numbers = #tpu.dot_dimension_numbers<[1], [0], [0], [1], [0, 0, 1, 1], [], []>} : vector<32x24xbf16>, vector<24x1024xbf16>, vector<32x1024xf32> -> vector<32x1024xf32>
    %21 = arith.addf %10, %20 : vector<32x1024xf32>
    %c0_12 = arith.constant 0 : index
    %c0_13 = arith.constant 0 : index
    %22 = vector.load %arg6[%c0_12, %c0_13] : memref<32x16xbf16, #tpu.memory_space<vmem>>, vector<32x16xbf16>
    %c0_14 = arith.constant 0 : index
    %c0_15 = arith.constant 0 : index
    %23 = vector.load %arg3[%c0_14, %c0_15] : memref<1024x16xf32, #tpu.memory_space<vmem>>, vector<1024x16xf32>
    %24 = arith.truncf %23 : vector<1024x16xf32> to vector<1024x16xbf16>
    %cst_16 = arith.constant dense<0.000000e+00> : vector<32x1024xf32>
    %25 = tpu.matmul %22, %24, %cst_16 {dimension_numbers = #tpu.dot_dimension_numbers<[1], [1], [0], [0], [0, 0, 1, 0], [], []>} : vector<32x16xbf16>, vector<1024x16xbf16>, vector<32x1024xf32> -> vector<32x1024xf32>
    %26 = arith.addf %21, %25 : vector<32x1024xf32>
    %c0_17 = arith.constant 0 : index
    %c0_18 = arith.constant 0 : index
    %27 = vector.load %arg7[%c0_17, %c0_18] : memref<32x1xf32, #tpu.memory_space<vmem>>, vector<32x1xf32>
    %c0_19 = arith.constant 0 : index
    %c0_20 = arith.constant 0 : index
    %28 = vector.load %arg8[%c0_19, %c0_20] : memref<32x32xbf16, #tpu.memory_space<vmem>>, vector<32x32xbf16>
    %c0_21 = arith.constant 0 : index
    %c0_22 = arith.constant 0 : index
    %29 = vector.load %arg9[%c0_21, %c0_22] : memref<32x1xf32, #tpu.memory_space<vmem>>, vector<32x1xf32>
    %c0_23 = arith.constant 0 : index
    %c0_24 = arith.constant 0 : index
    %30 = vector.load %arg10[%c0_23, %c0_24] : memref<32x1xf32, #tpu.memory_space<vmem>>, vector<32x1xf32>
    %c0_25 = arith.constant 0 : index
    %c0_26 = arith.constant 0 : index
    %31 = memref.load %arg11[%c0_25, %c0_26] : memref<1x1xf32, #tpu.memory_space<smem>>
    %32 = vector.broadcast %27 : vector<32x1xf32> to vector<32x1024xf32>
    %33 = arith.addf %26, %32 : vector<32x1024xf32>
    %cst_27 = arith.constant 0.000000e+00 : f32
    %34 = vector.broadcast %cst_27 : f32 to vector<32x1024xf32>
    %35 = arith.maximumf %33, %34 : vector<32x1024xf32>
    %36 = arith.truncf %35 : vector<32x1024xf32> to vector<32x1024xbf16>
    %cst_28 = arith.constant dense<0.000000e+00> : vector<32x1024xf32>
    %37 = tpu.matmul %28, %36, %cst_28 {dimension_numbers = #tpu.dot_dimension_numbers<[1], [0], [0], [1], [0, 0, 1, 1], [], []>} : vector<32x32xbf16>, vector<32x1024xbf16>, vector<32x1024xf32> -> vector<32x1024xf32>
    %38 = vector.broadcast %29 : vector<32x1xf32> to vector<32x1024xf32>
    %39 = arith.addf %37, %38 : vector<32x1024xf32>
    %cst_29 = arith.constant 0.000000e+00 : f32
    %40 = vector.broadcast %cst_29 : f32 to vector<32x1024xf32>
    %41 = arith.maximumf %39, %40 : vector<32x1024xf32>
    %42 = vector.broadcast %30 : vector<32x1xf32> to vector<32x1024xf32>
    %43 = arith.mulf %41, %42 : vector<32x1024xf32>
    %cst_30 = arith.constant dense<0.000000e+00> : vector<1024xf32>
    %44 = vector.multi_reduction <add>, %43, %cst_30 [0] : vector<32x1024xf32> to vector<1024xf32>
    %45 = vector.shape_cast %44 : vector<1024xf32> to vector<1x1024xf32>
    %46 = vector.broadcast %31 : f32 to vector<1x1024xf32>
    %47 = arith.addf %45, %46 : vector<1x1024xf32>
    %c0_31 = arith.constant 0 : index
    %c0_32 = arith.constant 0 : index
    %48 = vector.load %arg12[%c0_31, %c0_32] : memref<1x1024xf32, #tpu.memory_space<vmem>>, vector<1x1024xf32>
    tpu.vector_store %arg12[%c0_31, %c0_32], %47 {strides = array<i32>} : memref<1x1024xf32, #tpu.memory_space<vmem>>, vector<1x1024xf32>,
    return
  }
  func.func @transform_0(%arg0: i32) -> (i32, i32) {
    %c0_i32 = arith.constant 0 : i32
    %c0_i32_0 = arith.constant 0 : i32
    return %c0_i32, %arg0 : i32, i32
  }
  func.func @transform_1(%arg0: i32) -> (i32, i32) {
    %c0_i32 = arith.constant 0 : i32
    %c0_i32_0 = arith.constant 0 : i32
    return %c0_i32, %arg0 : i32, i32
  }
  func.func @transform_2(%arg0: i32) -> (i32, i32) {
    %c0_i32 = arith.constant 0 : i32
    %c0_i32_0 = arith.constant 0 : i32
    return %arg0, %c0_i32 : i32, i32
  }
  func.func @transform_3(%arg0: i32) -> (i32, i32) {
    %c0_i32 = arith.constant 0 : i32
    %c0_i32_0 = arith.constant 0 : i32
    %c0_i32_1 = arith.constant 0 : i32
    return %c0_i32, %c0_i32_0 : i32, i32
  }
  func.func @transform_4(%arg0: i32) -> (i32, i32) {
    %c0_i32 = arith.constant 0 : i32
    %c0_i32_0 = arith.constant 0 : i32
    %c0_i32_1 = arith.constant 0 : i32
    return %c0_i32, %c0_i32_0 : i32, i32
  }
  func.func @transform_5(%arg0: i32) -> (i32, i32) {
    %c0_i32 = arith.constant 0 : i32
    %c0_i32_0 = arith.constant 0 : i32
    %c0_i32_1 = arith.constant 0 : i32
    return %c0_i32, %c0_i32_0 : i32, i32
  }
  func.func @transform_6(%arg0: i32) -> (i32, i32) {
    %c0_i32 = arith.constant 0 : i32
    %c0_i32_0 = arith.constant 0 : i32
    %c0_i32_1 = arith.constant 0 : i32
    return %c0_i32, %c0_i32_0 : i32, i32
  }
  func.func @transform_7(%arg0: i32) -> (i32, i32) {
    %c0_i32 = arith.constant 0 : i32
    %c0_i32_0 = arith.constant 0 : i32
    %c0_i32_1 = arith.constant 0 : i32
    return %c0_i32, %c0_i32_0 : i32, i32
  }
  func.func @transform_8(%arg0: i32) -> (i32, i32) {
    %c0_i32 = arith.constant 0 : i32
    %c0_i32_0 = arith.constant 0 : i32
    %c0_i32_1 = arith.constant 0 : i32
    return %c0_i32, %c0_i32_0 : i32, i32
  }
  func.func @transform_9(%arg0: i32) -> (i32, i32) {
    %c0_i32 = arith.constant 0 : i32
    %c0_i32_0 = arith.constant 0 : i32
    %c0_i32_1 = arith.constant 0 : i32
    return %c0_i32, %c0_i32_0 : i32, i32
  }
  func.func @transform_10(%arg0: i32) -> (i32, i32) {
    %c0_i32 = arith.constant 0 : i32
    %c0_i32_0 = arith.constant 0 : i32
    %c0_i32_1 = arith.constant 0 : i32
    return %c0_i32, %c0_i32_0 : i32, i32
  }
  func.func @transform_11(%arg0: i32) -> (i32, i32) {
    %c0_i32 = arith.constant 0 : i32
    %c0_i32_0 = arith.constant 0 : i32
    return %c0_i32, %arg0 : i32, i32
  }
}

</mosaic_0001>

<llo_original>
// kernel: score_predictor_forward.1
$region0: #{score_predictor_forward.1}
  #allocation0 [shape = 'u32[]', space=smem, size = 0x4, offset = 0x4, fixed_abs, tag = 'smem constant byte address 0x4 - core index']
  #allocation1 [shape = 'u32[144,128]{1,0:T(1,128)}', space=vmem, size = 0x12000, scoped, tag = 'internal scratch']
  #allocation2 [shape = 'f32[1,1]{1,0:T(1,128)S(6)}', space=smem, size = 0x200, scoped, tag = 'scoped memory for score_predictor_forward.1']
  %s0 = inlined_call_operand.vmem [shape: s32[1,2000], index: 0, kind: input, shape index: {}]
  %s1 = inlined_call_operand.vmem [shape: s32[1,2000], index: 1, kind: input, shape index: {}]
  %s2 = inlined_call_operand.vmem [shape: f32[2000,16], index: 2, kind: input, shape index: {}]
  %s3 = inlined_call_operand.vmem [shape: bf16[32,24], index: 3, kind: input, shape index: {}]
  %s4 = inlined_call_operand.vmem [shape: bf16[32,24], index: 4, kind: input, shape index: {}]
  %s5 = inlined_call_operand.vmem [shape: bf16[32,16], index: 5, kind: input, shape index: {}]
  %s6 = inlined_call_operand.vmem [shape: f32[32,1], index: 6, kind: input, shape index: {}]
  %s7 = inlined_call_operand.vmem [shape: bf16[32,32], index: 7, kind: input, shape index: {}]
  %s8 = inlined_call_operand.vmem [shape: f32[32,1], index: 8, kind: input, shape index: {}]
  %s9 = inlined_call_operand.vmem [shape: f32[32,1], index: 9, kind: input, shape index: {}]
  %s10 = inlined_call_operand.<no memory space> [shape: f32[1,1], index: 10, kind: input, shape index: {}]
  %s11 = inlined_call_operand.hbm [shape: f32[1,2000], index: 11, kind: output, shape index: {}]
  %s12 = sld [smem:[#allocation0]]
  $region77: #{score_predictor_forward.1} parent=0
    _
  %s14 = ssub.s32 1, %s12
  %s15 = scalar_select 0, %s14, %s12
  %16 = sst [smem:[#allocation2]] %s10
  $region1: #{score_predictor_forward.1} parent=0
    #allocation3 [shape = 'u8[8192]{0}', space=vmem, size = 0x2000, scoped, tag = 'output window, operand 0']
    #allocation4 [shape = 's32[2]{0}', space=sflag, size = 0x8, scoped, tag = 'scoped memory for score_predictor_forward.1']
    %17 = vsyncpa [#allocation4], 0
    %s18 = scalar_lea.sflag [#allocation4], 1
    %19 = vsyncpa %s18, 0
    loop: start=0, step=1, limit=4
    $region2: #{score_predictor_forward.1} parent=1 // loop_pre_header
      _
    $region3: #{score_predictor_forward.1} parent=1 // loop_header
      %s21 = sphi 0, %s25
      %p22 = scmp.ge.s32.totalorder %s21, 4
      %s31 = sphi 0, %s33
      %s34 = sphi 0, %s31
      %s35 = sphi 0, %s34
      %s51 = sphi 0, %s35
      %s57 = sphi 0, %s59
      %s60 = sphi 0, %s57
      %s61 = sphi 0, %s60
      %s77 = sphi 0, %s61
      %s83 = sphi 0, %s85
      %s86 = sphi 0, %s83
      %s87 = sphi 0, %s86
      %s103 = sphi 0, %s87
      %s107 = sphi 0, %s107
      %s109 = sphi 0, %s107
      %s110 = sphi 0, %s109
      %s124 = sphi 0, %s110
      %s128 = sphi 0, %s128
      %s130 = sphi 0, %s128
      %s131 = sphi 0, %s130
      %s145 = sphi 0, %s131
      %s149 = sphi 0, %s149
      %s151 = sphi 0, %s149
      %s152 = sphi 0, %s151
      %s166 = sphi 0, %s152
      %s170 = sphi 0, %s170
      %s172 = sphi 0, %s170
      %s173 = sphi 0, %s172
      %s187 = sphi 0, %s173
      %s191 = sphi 0, %s191
      %s193 = sphi 0, %s191
      %s194 = sphi 0, %s193
      %s208 = sphi 0, %s194
      %s212 = sphi 0, %s212
      %s214 = sphi 0, %s212
      %s215 = sphi 0, %s214
      %s229 = sphi 0, %s215
      %s233 = sphi 0, %s233
      %s235 = sphi 0, %s233
      %s236 = sphi 0, %s235
      %s250 = sphi 0, %s236
      %s254 = sphi 0, %s254
      %s256 = sphi 0, %s254
      %s257 = sphi 0, %s256
      %s271 = sphi 0, %s257
      %s277 = sphi 0, %s279
      %s280 = sphi 0, %s277
      %s281 = sphi 0, %s280
      %s297 = sphi 0, %s281
    $region4: #{score_predictor_forward.1} parent=1 // loop_header_branch
      %24 = sbr.rel (%p22) target = $region8
    $region5: #{score_predictor_forward.1} parent=1 // loop_body
      %s26 = ssub.s32 %s21, 1
      %s27 = ssub.s32 %s21, 2
      %s28 = sadd.s32 %s21, 1
      %s29 = ssub.s32 %s21, %s28
      %p30 = scmp.eq.s32.totalorder %s29, 0
      %s32 = sadd.s32 %s31, 1
      %s33 = scalar_select %p30, %s31, %s32
      %p36 = pneg %p30
      %p37 = scmp.eq.s32.totalorder %s21, 1
      %p38 = por %p36, %p37
      %p39 = scmp.ne.s32.totalorder %s31, %s34
      %p40 = scmp.eq.s32.totalorder %s21, 0
      %p41 = por %p39, %p40
      %p42 = scmp.ne.s32.totalorder %s31, %s34
      %p43 = scmp.eq.s32.totalorder %s26, 1
      %p44 = por %p42, %p43
      %p45 = scmp.ne.s32.totalorder %s34, %s35
      %p46 = scmp.eq.s32.totalorder %s26, 0
      %p47 = por %p45, %p46
      %p48 = scmp.ne.s32.totalorder %s34, %s35
      %p49 = scmp.eq.s32.totalorder %s27, 1
      %p50 = por %p48, %p49
      %p52 = scmp.ne.s32.totalorder %s35, %s51
      %p53 = scmp.eq.s32.totalorder %s27, 0
      %p54 = por %p52, %p53
      %s55 = ssub.s32 %s21, %s28
      %p56 = scmp.eq.s32.totalorder %s55, 0
      %s58 = sadd.s32 %s57, 1
      %s59 = scalar_select %p56, %s57, %s58
      %p62 = pneg %p56
      %p63 = scmp.eq.s32.totalorder %s21, 1
      %p64 = por %p62, %p63
      %p65 = scmp.ne.s32.totalorder %s57, %s60
      %p66 = scmp.eq.s32.totalorder %s21, 0
      %p67 = por %p65, %p66
      %p68 = scmp.ne.s32.totalorder %s57, %s60
      %p69 = scmp.eq.s32.totalorder %s26, 1
      %p70 = por %p68, %p69
      %p71 = scmp.ne.s32.totalorder %s60, %s61
      %p72 = scmp.eq.s32.totalorder %s26, 0
      %p73 = por %p71, %p72
      %p74 = scmp.ne.s32.totalorder %s60, %s61
      %p75 = scmp.eq.s32.totalorder %s27, 1
      %p76 = por %p74, %p75
      %p78 = scmp.ne.s32.totalorder %s61, %s77
      %p79 = scmp.eq.s32.totalorder %s27, 0
      %p80 = por %p78, %p79
      %s81 = ssub.s32 %s21, %s28
      %p82 = scmp.eq.s32.totalorder %s81, 0
      %s84 = sadd.s32 %s83, 1
      %s85 = scalar_select %p82, %s83, %s84
      %p88 = pneg %p82
      %p89 = scmp.eq.s32.totalorder %s21, 1
      %p90 = por %p88, %p89
      %p91 = scmp.ne.s32.totalorder %s83, %s86
      %p92 = scmp.eq.s32.totalorder %s21, 0
      %p93 = por %p91, %p92
      %p94 = scmp.ne.s32.totalorder %s83, %s86
      %p95 = scmp.eq.s32.totalorder %s26, 1
      %p96 = por %p94, %p95
      %p97 = scmp.ne.s32.totalorder %s86, %s87
      %p98 = scmp.eq.s32.totalorder %s26, 0
      %p99 = por %p97, %p98
      %p100 = scmp.ne.s32.totalorder %s86, %s87
      %p101 = scmp.eq.s32.totalorder %s27, 1
      %p102 = por %p100, %p101
      %p104 = scmp.ne.s32.totalorder %s87, %s103
      %p105 = scmp.eq.s32.totalorder %s27, 0
      %p106 = por %p104, %p105
      %s108 = sadd.s32 %s107, 1
      %p111 = scmp.eq.s32.totalorder %s21, 1
      %p112 = scmp.ne.s32.totalorder %s107, %s109
      %p113 = scmp.eq.s32.totalorder %s21, 0
      %p114 = por %p112, %p113
      %p115 = scmp.ne.s32.totalorder %s107, %s109
      %p116 = scmp.eq.s32.totalorder %s26, 1
      %p117 = por %p115, %p116
      %p118 = scmp.ne.s32.totalorder %s109, %s110
      %p119 = scmp.eq.s32.totalorder %s26, 0
      %p120 = por %p118, %p119
      %p121 = scmp.ne.s32.totalorder %s109, %s110
      %p122 = scmp.eq.s32.totalorder %s27, 1
      %p123 = por %p121, %p122
      %p125 = scmp.ne.s32.totalorder %s110, %s124
      %p126 = scmp.eq.s32.totalorder %s27, 0
      %p127 = por %p125, %p126
      %s129 = sadd.s32 %s128, 1
      %p132 = scmp.eq.s32.totalorder %s21, 1
      %p133 = scmp.ne.s32.totalorder %s128, %s130
      %p134 = scmp.eq.s32.totalorder %s21, 0
      %p135 = por %p133, %p134
      %p136 = scmp.ne.s32.totalorder %s128, %s130
      %p137 = scmp.eq.s32.totalorder %s26, 1
      %p138 = por %p136, %p137
      %p139 = scmp.ne.s32.totalorder %s130, %s131
      %p140 = scmp.eq.s32.totalorder %s26, 0
      %p141 = por %p139, %p140
      %p142 = scmp.ne.s32.totalorder %s130, %s131
      %p143 = scmp.eq.s32.totalorder %s27, 1
      %p144 = por %p142, %p143
      %p146 = scmp.ne.s32.totalorder %s131, %s145
      %p147 = scmp.eq.s32.totalorder %s27, 0
      %p148 = por %p146, %p147
      %s150 = sadd.s32 %s149, 1
      %p153 = scmp.eq.s32.totalorder %s21, 1
      %p154 = scmp.ne.s32.totalorder %s149, %s151
      %p155 = scmp.eq.s32.totalorder %s21, 0
      %p156 = por %p154, %p155
      %p157 = scmp.ne.s32.totalorder %s149, %s151
      %p158 = scmp.eq.s32.totalorder %s26, 1
      %p159 = por %p157, %p158
      %p160 = scmp.ne.s32.totalorder %s151, %s152
      %p161 = scmp.eq.s32.totalorder %s26, 0
      %p162 = por %p160, %p161
      %p163 = scmp.ne.s32.totalorder %s151, %s152
      %p164 = scmp.eq.s32.totalorder %s27, 1
      %p165 = por %p163, %p164
      %p167 = scmp.ne.s32.totalorder %s152, %s166
      %p168 = scmp.eq.s32.totalorder %s27, 0
      %p169 = por %p167, %p168
      %s171 = sadd.s32 %s170, 1
      %p174 = scmp.eq.s32.totalorder %s21, 1
      %p175 = scmp.ne.s32.totalorder %s170, %s172
      %p176 = scmp.eq.s32.totalorder %s21, 0
      %p177 = por %p175, %p176
      %p178 = scmp.ne.s32.totalorder %s170, %s172
      %p179 = scmp.eq.s32.totalorder %s26, 1
      %p180 = por %p178, %p179
      %p181 = scmp.ne.s32.totalorder %s172, %s173
      %p182 = scmp.eq.s32.totalorder %s26, 0
      %p183 = por %p181, %p182
      %p184 = scmp.ne.s32.totalorder %s172, %s173
      %p185 = scmp.eq.s32.totalorder %s27, 1
      %p186 = por %p184, %p185
      %p188 = scmp.ne.s32.totalorder %s173, %s187
      %p189 = scmp.eq.s32.totalorder %s27, 0
      %p190 = por %p188, %p189
      %s192 = sadd.s32 %s191, 1
      %p195 = scmp.eq.s32.totalorder %s21, 1
      %p196 = scmp.ne.s32.totalorder %s191, %s193
      %p197 = scmp.eq.s32.totalorder %s21, 0
      %p198 = por %p196, %p197
      %p199 = scmp.ne.s32.totalorder %s191, %s193
      %p200 = scmp.eq.s32.totalorder %s26, 1
      %p201 = por %p199, %p200
      %p202 = scmp.ne.s32.totalorder %s193, %s194
      %p203 = scmp.eq.s32.totalorder %s26, 0
      %p204 = por %p202, %p203
      %p205 = scmp.ne.s32.totalorder %s193, %s194
      %p206 = scmp.eq.s32.totalorder %s27, 1
      %p207 = por %p205, %p206
      %p209 = scmp.ne.s32.totalorder %s194, %s208
      %p210 = scmp.eq.s32.totalorder %s27, 0
      %p211 = por %p209, %p210
      %s213 = sadd.s32 %s212, 1
      %p216 = scmp.eq.s32.totalorder %s21, 1
      %p217 = scmp.ne.s32.totalorder %s212, %s214
      %p218 = scmp.eq.s32.totalorder %s21, 0
      %p219 = por %p217, %p218
      %p220 = scmp.ne.s32.totalorder %s212, %s214
      %p221 = scmp.eq.s32.totalorder %s26, 1
      %p222 = por %p220, %p221
      %p223 = scmp.ne.s32.totalorder %s214, %s215
      %p224 = scmp.eq.s32.totalorder %s26, 0
      %p225 = por %p223, %p224
      %p226 = scmp.ne.s32.totalorder %s214, %s215
      %p227 = scmp.eq.s32.totalorder %s27, 1
      %p228 = por %p226, %p227
      %p230 = scmp.ne.s32.totalorder %s215, %s229
      %p231 = scmp.eq.s32.totalorder %s27, 0
      %p232 = por %p230, %p231
      %s234 = sadd.s32 %s233, 1
      %p237 = scmp.eq.s32.totalorder %s21, 1
      %p238 = scmp.ne.s32.totalorder %s233, %s235
      %p239 = scmp.eq.s32.totalorder %s21, 0
      %p240 = por %p238, %p239
      %p241 = scmp.ne.s32.totalorder %s233, %s235
      %p242 = scmp.eq.s32.totalorder %s26, 1
      %p243 = por %p241, %p242
      %p244 = scmp.ne.s32.totalorder %s235, %s236
      %p245 = scmp.eq.s32.totalorder %s26, 0
      %p246 = por %p244, %p245
      %p247 = scmp.ne.s32.totalorder %s235, %s236
      %p248 = scmp.eq.s32.totalorder %s27, 1
      %p249 = por %p247, %p248
      %p251 = scmp.ne.s32.totalorder %s236, %s250
      %p252 = scmp.eq.s32.totalorder %s27, 0
      %p253 = por %p251, %p252
      %s255 = sadd.s32 %s254, 1
      %p258 = scmp.eq.s32.totalorder %s21, 1
      %p259 = scmp.ne.s32.totalorder %s254, %s256
      %p260 = scmp.eq.s32.totalorder %s21, 0
      %p261 = por %p259, %p260
      %p262 = scmp.ne.s32.totalorder %s254, %s256
      %p263 = scmp.eq.s32.totalorder %s26, 1
      %p264 = por %p262, %p263
      %p265 = scmp.ne.s32.totalorder %s256, %s257
      %p266 = scmp.eq.s32.totalorder %s26, 0
      %p267 = por %p265, %p266
      %p268 = scmp.ne.s32.totalorder %s256, %s257
      %p269 = scmp.eq.s32.totalorder %s27, 1
      %p270 = por %p268, %p269
      %p272 = scmp.ne.s32.totalorder %s257, %s271
      %p273 = scmp.eq.s32.totalorder %s27, 0
      %p274 = por %p272, %p273
      %s275 = ssub.s32 %s21, %s28
      %p276 = scmp.eq.s32.totalorder %s275, 0
      %s278 = sadd.s32 %s277, 1
      %s279 = scalar_select %p276, %s277, %s278
      %p282 = pneg %p276
      %p283 = scmp.eq.s32.totalorder %s21, 1
      %p284 = por %p282, %p283
      %p285 = scmp.ne.s32.totalorder %s277, %s280
      %p286 = scmp.eq.s32.totalorder %s21, 0
      %p287 = por %p285, %p286
      %p288 = scmp.ne.s32.totalorder %s277, %s280
      %p289 = scmp.eq.s32.totalorder %s26, 1
      %p290 = por %p288, %p289
      %p291 = scmp.ne.s32.totalorder %s280, %s281
      %p292 = scmp.eq.s32.totalorder %s26, 0
      %p293 = por %p291, %p292
      %p294 = scmp.ne.s32.totalorder %s280, %s281
      %p295 = scmp.eq.s32.totalorder %s27, 1
      %p296 = por %p294, %p295
      %p298 = scmp.ne.s32.totalorder %s281, %s297
      %p299 = scmp.eq.s32.totalorder %s27, 0
      %p300 = por %p298, %p299
      %p301 = scmp.le.s32.totalorder 1, %s21
      %p302 = scmp.lt.s32.totalorder %s21, 3
      %p303 = pnand %p301, %p302
      %p304 = pneg %p303
      // Predicated region
      $region9: #{score_predictor_forward.1} parent=5 // pred_check
        _
      $region10: #{score_predictor_forward.1} parent=5 // pred_check_branch
        %306 = sbr.rel (%p303) target = $region12
      $region11: #{score_predictor_forward.1} parent=5 // pred_region
        %s307 = ssub.s32 %s21, 1
        // Predicated region
        $region13: #{score_predictor_forward.1} parent=11 // pred_check
          %p308 = pneg %p120
        $region14: #{score_predictor_forward.1} parent=11 // pred_check_branch
          %310 = sbr.rel (%p308) target = $region16
        $region15: #{score_predictor_forward.1} parent=11 // pred_region
          _
        $region16: #{score_predictor_forward.1} parent=11 // pred_fallthru
          _
        // Predicated region
        $region17: #{score_predictor_forward.1} parent=11 // pred_check
          %p311 = pneg %p141
        $region18: #{score_predictor_forward.1} parent=11 // pred_check_branch
          %313 = sbr.rel (%p311) target = $region20
        $region19: #{score_predictor_forward.1} parent=11 // pred_region
          _
        $region20: #{score_predictor_forward.1} parent=11 // pred_fallthru
          _
        // Predicated region
        $region21: #{score_predictor_forward.1} parent=11 // pred_check
          %p314 = pneg %p162
        $region22: #{score_predictor_forward.1} parent=11 // pred_check_branch
          %316 = sbr.rel (%p314) target = $region24
        $region23: #{score_predictor_forward.1} parent=11 // pred_region
          _
        $region24: #{score_predictor_forward.1} parent=11 // pred_fallthru
          _
        // Predicated region
        $region25: #{score_predictor_forward.1} parent=11 // pred_check
          %p317 = pneg %p183
        $region26: #{score_predictor_forward.1} parent=11 // pred_check_branch
          %319 = sbr.rel (%p317) target = $region28
        $region27: #{score_predictor_forward.1} parent=11 // pred_region
          _
        $region28: #{score_predictor_forward.1} parent=11 // pred_fallthru
          _
        // Predicated region
        $region29: #{score_predictor_forward.1} parent=11 // pred_check
          %p320 = pneg %p204
        $region30: #{score_predictor_forward.1} parent=11 // pred_check_branch
          %322 = sbr.rel (%p320) target = $region32
        $region31: #{score_predictor_forward.1} parent=11 // pred_region
          _
        $region32: #{score_predictor_forward.1} parent=11 // pred_fallthru
          _
        // Predicated region
        $region33: #{score_predictor_forward.1} parent=11 // pred_check
          %p323 = pneg %p225
        $region34: #{score_predictor_forward.1} parent=11 // pred_check_branch
          %325 = sbr.rel (%p323) target = $region36
        $region35: #{score_predictor_forward.1} parent=11 // pred_region
          _
        $region36: #{score_predictor_forward.1} parent=11 // pred_fallthru
          _
        // Predicated region
        $region37: #{score_predictor_forward.1} parent=11 // pred_check
          %p326 = pneg %p246
        $region38: #{score_predictor_forward.1} parent=11 // pred_check_branch
          %328 = sbr.rel (%p326) target = $region40
        $region39: #{score_predictor_forward.1} parent=11 // pred_region
          _
        $region40: #{score_predictor_forward.1} parent=11 // pred_fallthru
          _
        // Predicated region
        $region41: #{score_predictor_forward.1} parent=11 // pred_check
          %p329 = pneg %p267
        $region42: #{score_predictor_forward.1} parent=11 // pred_check_branch
          %331 = sbr.rel (%p329) target = $region44
        $region43: #{score_predictor_forward.1} parent=11 // pred_region
          _
        $region44: #{score_predictor_forward.1} parent=11 // pred_fallthru
          _
      $region12: #{score_predictor_forward.1} parent=5 // pred_fallthru
        _
      %p332 = scmp.lt.s32.totalorder %s21, 2
      // Predicated region
      $region45: #{score_predictor_forward.1} parent=5 // pred_check
        %p333 = pneg %p332
      $region46: #{score_predictor_forward.1} parent=5 // pred_check_branch
        %335 = sbr.rel (%p333) target = $region48
      $region47: #{score_predictor_forward.1} parent=5 // pred_region
        // Predicated region
        $region49: #{score_predictor_forward.1} parent=47 // pred_check
          %p336 = pneg %p41
        $region50: #{score_predictor_forward.1} parent=47 // pred_check_branch
          %338 = sbr.rel (%p336) target = $region52
        $region51: #{score_predictor_forward.1} parent=47 // pred_region
          %s339 = smul.u32 8, %s21
          %p340 = scmp.lt.s32.totalorder %s339, 15
          %s341 = scalar_select %p340, %s339, 15
          %s342 = scalar_lea.vmem %s0, %s341
          %s343 = smul.u32 8, %s21
        $region52: #{score_predictor_forward.1} parent=47 // pred_fallthru
          _
        // Predicated region
        $region53: #{score_predictor_forward.1} parent=47 // pred_check
          %p344 = pneg %p67
        $region54: #{score_predictor_forward.1} parent=47 // pred_check_branch
          %346 = sbr.rel (%p344) target = $region56
        $region55: #{score_predictor_forward.1} parent=47 // pred_region
          %s347 = smul.u32 8, %s21
          %p348 = scmp.lt.s32.totalorder %s347, 15
          %s349 = scalar_select %p348, %s347, 15
          %s350 = scalar_lea.vmem %s1, %s349
          %s351 = smul.u32 8, %s21
        $region56: #{score_predictor_forward.1} parent=47 // pred_fallthru
          _
        // Predicated region
        $region57: #{score_predictor_forward.1} parent=47 // pred_check
          %p352 = pneg %p93
        $region58: #{score_predictor_forward.1} parent=47 // pred_check_branch
          %354 = sbr.rel (%p352) target = $region60
        $region59: #{score_predictor_forward.1} parent=47 // pred_region
          %s355 = smul.u32 128, %s21
          %s356 = ssub.s32 250, %s355
          %p357 = scmp.lt.s32.totalorder %s356, 128
          %s358 = scalar_select %p357, %s356, 128
          %s359 = smul.u32 128, %s358
          %p360 = scmp.lt.s32.totalorder %s355, 249
          %s361 = scalar_select %p360, %s355, 249
          %s362 = smul.addr %s361, 8
          %s363 = scalar_lea.vmem %s2, %s362
          %s364 = smul.u32 128, %s21
          %s365 = ssub.s32 250, %s364
          %p366 = scmp.lt.s32.totalorder %s365, 128
          %s367 = scalar_select %p366, %s365, 128
          %s368 = smul.u32 128, %s367
        $region60: #{score_predictor_forward.1} parent=47 // pred_fallthru
          _
      $region48: #{score_predictor_forward.1} parent=5 // pred_fallthru
        _
      %p369 = scmp.le.s32.totalorder 1, %s21
      %p370 = scmp.lt.s32.totalorder %s21, 3
      %p371 = pnand %p369, %p370
      %p372 = pneg %p371
      // Predicated region
      $region61: #{score_predictor_forward.1} parent=5 // pred_check
        _
      $region62: #{score_predictor_forward.1} parent=5 // pred_check_branch
        %374 = sbr.rel (%p371) target = $region64
      $region63: #{score_predictor_forward.1} parent=5 // pred_region
        %s375 = ssub.s32 %s21, 1
        %s376 = smul.u32 8, %s26
        %p377 = scmp.lt.s32.totalorder %s376, 15
        %s378 = scalar_select %p377, %s376, 15
        %s379 = scalar_lea.vmem %s0, %s378
        %p380 = pneg %p47
        %p381 = pneg %p44
        %s382 = smul.u32 8, %s26
        %p383 = scmp.lt.s32.totalorder %s382, 15
        %s384 = scalar_select %p383, %s382, 15
        %s385 = scalar_lea.vmem %s1, %s384
        %p386 = pneg %p73
        %p387 = pneg %p70
        %s388 = smul.u32 128, %s26
        %s389 = ssub.s32 250, %s388
        %p390 = scmp.lt.s32.totalorder %s389, 128
        %s391 = scalar_select %p390, %s389, 128
        %s392 = smul.u32 128, %s391
        %p393 = scmp.lt.s32.totalorder %s388, 249
        %s394 = scalar_select %p393, %s388, 249
        %s395 = smul.addr %s394, 8
        %s396 = scalar_lea.vmem %s2, %s395
        %p397 = pneg %p99
        %p398 = pneg %p96
        %p399 = pneg %p120
        %p400 = pneg %p117
        %p401 = pneg %p141
        %p402 = pneg %p138
        %p403 = pneg %p162
        %p404 = pneg %p159
        %p405 = pneg %p183
        %p406 = pneg %p180
        %p407 = pneg %p204
        %p408 = pneg %p201
        %p409 = pneg %p225
        %p410 = pneg %p222
        %p411 = pneg %p246
        %p412 = pneg %p243
        %p413 = pneg %p267
        %p414 = pneg %p264
        %p415 = pneg %p293
        %p416 = pneg %p290
        %s417 = sand.u32 %s280, 1
        %s418 = scalar_lea.sflag [#allocation4], %s417
        %s419 = sand.u32 %s280, 1
        %s420 = smul.addr %s419, 8
        %s421 = scalar_lea.vmem [#allocation3], %s420
        %s422 = smul.u32 8, %s26
        %p423 = scmp.lt.s32.totalorder %s422, 15
        %s424 = scalar_select %p423, %s422, 15
        %s425 = scalar_lea.vmem %s0, %s424
        %s426 = smul.u32 8, %s26
        %s427 = smul.u32 8, %s26
        %p428 = scmp.lt.s32.totalorder %s427, 15
        %s429 = scalar_select %p428, %s427, 15
        %s430 = scalar_lea.vmem %s1, %s429
        %s431 = smul.u32 8, %s26
        %s432 = smul.u32 128, %s26
        %s433 = ssub.s32 250, %s432
        %p434 = scmp.lt.s32.totalorder %s433, 128
        %s435 = scalar_select %p434, %s433, 128
        %s436 = smul.u32 128, %s435
        %p437 = scmp.lt.s32.totalorder %s432, 249
        %s438 = scalar_select %p437, %s432, 249
        %s439 = smul.addr %s438, 8
        %s440 = scalar_lea.vmem %s2, %s439
        %s441 = smul.u32 128, %s26
        %s442 = ssub.s32 250, %s441
        %p443 = scmp.lt.s32.totalorder %s442, 128
        %s444 = scalar_select %p443, %s442, 128
        %s445 = smul.u32 128, %s444
        %s446 = smul.u32 8, %s26
        %v448 = vlaneseq
        %v449 = vshrl.u32 %v448, 7
        %v450 = vadd.s32 %v449, 8
        %v451 = vadd.s32 %v449, 16
        %v452 = vld [vmem:[%s425] sm:$0xff]
        %v453 = vlaneseq
        %v454 = vshrl.u32 %v453, 7
        %v455 = vsub.s32 0, %v454
        %v456 = vrot.slane %v452, %v455
        %v457 = vlaneseq
        %v458 = vshrl.u32 %v457, 7
        %v459 = vsub.s32 1, %v458
        %v460 = vrot.slane %v452, %v459
        %v461 = vlaneseq
        %v462 = vshrl.u32 %v461, 7
        %v463 = vsub.s32 2, %v462
        %v464 = vrot.slane %v452, %v463
        %v465 = vlaneseq
        %v466 = vshrl.u32 %v465, 7
        %v467 = vsub.s32 3, %v466
        %v468 = vrot.slane %v452, %v467
        %v469 = vlaneseq
        %v470 = vshrl.u32 %v469, 7
        %v471 = vsub.s32 4, %v470
        %v472 = vrot.slane %v452, %v471
        %v473 = vlaneseq
        %v474 = vshrl.u32 %v473, 7
        %v475 = vsub.s32 5, %v474
        %v476 = vrot.slane %v452, %v475
        %v477 = vlaneseq
        %v478 = vshrl.u32 %v477, 7
        %v479 = vsub.s32 6, %v478
        %v480 = vrot.slane %v452, %v479
        %v481 = vlaneseq
        %v482 = vshrl.u32 %v481, 7
        %v483 = vsub.s32 7, %v482
        %v484 = vrot.slane %v452, %v483
        %vm485 = vcmp.eq.s32.totalorder %v449, %v456
        %vm486 = vcmp.eq.s32.totalorder %v449, %v460
        %vm487 = vcmp.eq.s32.totalorder %v449, %v464
        %vm488 = vcmp.eq.s32.totalorder %v449, %v468
        %vm489 = vcmp.eq.s32.totalorder %v449, %v472
        %vm490 = vcmp.eq.s32.totalorder %v449, %v476
        %vm491 = vcmp.eq.s32.totalorder %v449, %v480
        %vm492 = vcmp.eq.s32.totalorder %v449, %v484
        %vm493 = vcmp.eq.s32.totalorder %v450, %v456
        %vm494 = vcmp.eq.s32.totalorder %v450, %v460
        %vm495 = vcmp.eq.s32.totalorder %v450, %v464
        %vm496 = vcmp.eq.s32.totalorder %v450, %v468
        %vm497 = vcmp.eq.s32.totalorder %v450, %v472
        %vm498 = vcmp.eq.s32.totalorder %v450, %v476
        %vm499 = vcmp.eq.s32.totalorder %v450, %v480
        %vm500 = vcmp.eq.s32.totalorder %v450, %v484
        %vm501 = vcmp.eq.s32.totalorder %v451, %v456
        %vm502 = vcmp.eq.s32.totalorder %v451, %v460
        %vm503 = vcmp.eq.s32.totalorder %v451, %v464
        %vm504 = vcmp.eq.s32.totalorder %v451, %v468
        %vm505 = vcmp.eq.s32.totalorder %v451, %v472
        %vm506 = vcmp.eq.s32.totalorder %v451, %v476
        %vm507 = vcmp.eq.s32.totalorder %v451, %v480
        %vm508 = vcmp.eq.s32.totalorder %v451, %v484
        %v509 = vsel %vm485, 1.0, 0.0
        %v510 = vsel %vm486, 1.0, 0.0
        %v511 = vsel %vm487, 1.0, 0.0
        %v512 = vsel %vm488, 1.0, 0.0
        %v513 = vsel %vm489, 1.0, 0.0
        %v514 = vsel %vm490, 1.0, 0.0
        %v515 = vsel %vm491, 1.0, 0.0
        %v516 = vsel %vm492, 1.0, 0.0
        %v517 = vsel %vm493, 1.0, 0.0
        %v518 = vsel %vm494, 1.0, 0.0
        %v519 = vsel %vm495, 1.0, 0.0
        %v520 = vsel %vm496, 1.0, 0.0
        %v521 = vsel %vm497, 1.0, 0.0
        %v522 = vsel %vm498, 1.0, 0.0
        %v523 = vsel %vm499, 1.0, 0.0
        %v524 = vsel %vm500, 1.0, 0.0
        %v525 = vsel %vm501, 1.0, 0.0
        %v526 = vsel %vm502, 1.0, 0.0
        %v527 = vsel %vm503, 1.0, 0.0
        %v528 = vsel %vm504, 1.0, 0.0
        %v529 = vsel %vm505, 1.0, 0.0
        %v530 = vsel %vm506, 1.0, 0.0
        %v531 = vsel %vm507, 1.0, 0.0
        %v532 = vsel %vm508, 1.0, 0.0
        %v533 = vpack.c.bf16 %v517, %v509
        %v534 = vpack.c.bf16 %v518, %v510
        %v535 = vpack.c.bf16 %v519, %v511
        %v536 = vpack.c.bf16 %v520, %v512
        %v537 = vpack.c.bf16 %v521, %v513
        %v538 = vpack.c.bf16 %v522, %v514
        %v539 = vpack.c.bf16 %v523, %v515
        %v540 = vpack.c.bf16 %v524, %v516
        %v541 = vpack.c.bf16 %v525, %v525
        %v542 = vpack.c.bf16 %v526, %v526
        %v543 = vpack.c.bf16 %v527, %v527
        %v544 = vpack.c.bf16 %v528, %v528
        %v545 = vpack.c.bf16 %v529, %v529
        %v546 = vpack.c.bf16 %v530, %v530
        %v547 = vpack.c.bf16 %v531, %v531
        %v548 = vpack.c.bf16 %v532, %v532
        %v549 = vld [vmem:[%s3] sm:$0xf]
        %v550 = vld [vmem:[%s3 + $0x4] sm:$0xf]
        %v551 = vld [vmem:[%s3 + $0x8] sm:$0xf]
        %v552 = vld [vmem:[%s3 + $0xc] sm:$0xf]
        %v553 = vld [vmem:[%s430] sm:$0xff]
        %v554 = vlaneseq
        %v555 = vshrl.u32 %v554, 7
        %v556 = vsub.s32 0, %v555
        %v557 = vrot.slane %v553, %v556
        %v558 = vlaneseq
        %v559 = vshrl.u32 %v558, 7
        %v560 = vsub.s32 1, %v559
        %v561 = vrot.slane %v553, %v560
        %v562 = vlaneseq
        %v563 = vshrl.u32 %v562, 7
        %v564 = vsub.s32 2, %v563
        %v565 = vrot.slane %v553, %v564
        %v566 = vlaneseq
        %v567 = vshrl.u32 %v566, 7
        %v568 = vsub.s32 3, %v567
        %v569 = vrot.slane %v553, %v568
        %v570 = vlaneseq
        %v571 = vshrl.u32 %v570, 7
        %v572 = vsub.s32 4, %v571
        %v573 = vrot.slane %v553, %v572
        %v574 = vlaneseq
        %v575 = vshrl.u32 %v574, 7
        %v576 = vsub.s32 5, %v575
        %v577 = vrot.slane %v553, %v576
        %v578 = vlaneseq
        %v579 = vshrl.u32 %v578, 7
        %v580 = vsub.s32 6, %v579
        %v581 = vrot.slane %v553, %v580
        %v582 = vlaneseq
        %v583 = vshrl.u32 %v582, 7
        %v584 = vsub.s32 7, %v583
        %v585 = vrot.slane %v553, %v584
        %vm586 = vcmp.eq.s32.totalorder %v449, %v557
        %vm587 = vcmp.eq.s32.totalorder %v449, %v561
        %vm588 = vcmp.eq.s32.totalorder %v449, %v565
        %vm589 = vcmp.eq.s32.totalorder %v449, %v569
        %vm590 = vcmp.eq.s32.totalorder %v449, %v573
        %vm591 = vcmp.eq.s32.totalorder %v449, %v577
        %vm592 = vcmp.eq.s32.totalorder %v449, %v581
        %vm593 = vcmp.eq.s32.totalorder %v449, %v585
        %vm594 = vcmp.eq.s32.totalorder %v450, %v557
        %vm595 = vcmp.eq.s32.totalorder %v450, %v561
        %vm596 = vcmp.eq.s32.totalorder %v450, %v565
        %vm597 = vcmp.eq.s32.totalorder %v450, %v569
        %vm598 = vcmp.eq.s32.totalorder %v450, %v573
        %vm599 = vcmp.eq.s32.totalorder %v450, %v577
        %vm600 = vcmp.eq.s32.totalorder %v450, %v581
        %vm601 = vcmp.eq.s32.totalorder %v450, %v585
        %vm602 = vcmp.eq.s32.totalorder %v451, %v557
        %vm603 = vcmp.eq.s32.totalorder %v451, %v561
        %vm604 = vcmp.eq.s32.totalorder %v451, %v565
        %vm605 = vcmp.eq.s32.totalorder %v451, %v569
        %vm606 = vcmp.eq.s32.totalorder %v451, %v573
        %vm607 = vcmp.eq.s32.totalorder %v451, %v577
        %vm608 = vcmp.eq.s32.totalorder %v451, %v581
        %vm609 = vcmp.eq.s32.totalorder %v451, %v585
        %v610 = vsel %vm586, 1.0, 0.0
        %v611 = vsel %vm587, 1.0, 0.0
        %v612 = vsel %vm588, 1.0, 0.0
        %v613 = vsel %vm589, 1.0, 0.0
        %v614 = vsel %vm590, 1.0, 0.0
        %v615 = vsel %vm591, 1.0, 0.0
        %v616 = vsel %vm592, 1.0, 0.0
        %v617 = vsel %vm593, 1.0, 0.0
        %v618 = vsel %vm594, 1.0, 0.0
        %v619 = vsel %vm595, 1.0, 0.0
        %v620 = vsel %vm596, 1.0, 0.0
        %v621 = vsel %vm597, 1.0, 0.0
        %v622 = vsel %vm598, 1.0, 0.0
        %v623 = vsel %vm599, 1.0, 0.0
        %v624 = vsel %vm600, 1.0, 0.0
        %v625 = vsel %vm601, 1.0, 0.0
        %v626 = vsel %vm602, 1.0, 0.0
        %v627 = vsel %vm603, 1.0, 0.0
        %v628 = vsel %vm604, 1.0, 0.0
        %v629 = vsel %vm605, 1.0, 0.0
        %v630 = vsel %vm606, 1.0, 0.0
        %v631 = vsel %vm607, 1.0, 0.0
        %v632 = vsel %vm608, 1.0, 0.0
        %v633 = vsel %vm609, 1.0, 0.0
        %v634 = vpack.c.bf16 %v618, %v610
        %v635 = vpack.c.bf16 %v619, %v611
        %v636 = vpack.c.bf16 %v620, %v612
        %v637 = vpack.c.bf16 %v621, %v613
        %v638 = vpack.c.bf16 %v622, %v614
        %v639 = vpack.c.bf16 %v623, %v615
        %v640 = vpack.c.bf16 %v624, %v616
        %v641 = vpack.c.bf16 %v625, %v617
        %v642 = vpack.c.bf16 %v626, %v626
        %v643 = vpack.c.bf16 %v627, %v627
        %v644 = vpack.c.bf16 %v628, %v628
        %v645 = vpack.c.bf16 %v629, %v629
        %v646 = vpack.c.bf16 %v630, %v630
        %v647 = vpack.c.bf16 %v631, %v631
        %v648 = vpack.c.bf16 %v632, %v632
        %v649 = vpack.c.bf16 %v633, %v633
        %v650 = vld [vmem:[%s4] sm:$0xf]
        %v651 = vld [vmem:[%s4 + $0x4] sm:$0xf]
        %v652 = vld [vmem:[%s4 + $0x8] sm:$0xf]
        %v653 = vld [vmem:[%s4 + $0xc] sm:$0xf]
        %v658 = vunpack.c.l.b16 %v650
        %v659 = vunpack.c.l.b16 %v651
        %v660 = vunpack.c.l.b16 %v652
        %v661 = vunpack.c.l.b16 %v653
        %v662 = vpack.c.b16 %v659, %v658
        %v663 = vpack.c.b16 %v661, %v660
        %vm664 = vcmask 195584
        %v666 = vsel %vm664, %v662, 0
        %v669 = vsel %vm664, %v663, 0
        %vm671 = vcmask 1043456
        %v673 = vsel %vm671, %v642, 0
        %v676 = vsel %vm671, %v643, 0
        %v679 = vsel %vm671, %v644, 0
        %v682 = vsel %vm671, %v645, 0
        %v685 = vsel %vm671, %v646, 0
        %v688 = vsel %vm671, %v647, 0
        %v691 = vsel %vm671, %v648, 0
        %v694 = vsel %vm671, %v649, 0
        %696 = vmatprep.subr.bf16.mxu0 %v635
        %697 = vmatpush1.bf16.msra.mxu0 %v634
        %698 = vmatprep.subr.bf16.mxu0 %v676
        %699 = vmatpush1.bf16.msra.mxu0 %v673
        %700 = vmatprep.subr.bf16.mxu0 0
        %701 = vmatpush1.bf16.msra.mxu0 0
        %702 = vmatprep.subr.bf16.mxu0 0
        %703 = vmatpush1.bf16.msra.mxu0 0
        %704 = vmatprep.subr.bf16.mxu0 0
        %705 = vmatpush1.bf16.msra.mxu0 0
        %706 = vmatprep.subr.bf16.mxu0 0
        %707 = vmatpush1.bf16.msra.mxu0 0
        %708 = vmatprep.subr.bf16.mxu0 0
        %709 = vmatpush1.bf16.msra.mxu0 0
        %710 = vmatprep.subr.bf16.mxu0 0
        %711 = vmatpush1.bf16.msra.mxu0 0
        %712 = vmatprep.subr.bf16.mxu0 0
        %713 = vmatpush1.bf16.msra.mxu0 0
        %714 = vmatprep.subr.bf16.mxu0 0
        %715 = vmatpush1.bf16.msra.mxu0 0
        %716 = vmatprep.subr.bf16.mxu0 0
        %717 = vmatpush1.bf16.msra.mxu0 0
        %718 = vmatprep.subr.bf16.mxu0 0
        %719 = vmatpush1.bf16.msra.mxu0 0
        %720 = vmatprep.subr.bf16.mxu0 0
        %721 = vmatpush1.bf16.msra.mxu0 0
        %722 = vmatprep.subr.bf16.mxu0 0
        %723 = vmatpush1.bf16.msra.mxu0 0
        %724 = vmatprep.subr.bf16.mxu0 0
        %725 = vmatpush1.bf16.msra.mxu0 0
        %726 = vmatprep.subr.bf16.mxu0 0
        %727 = vmatpush1.bf16.msra.mxu0 0
        %728 = vmatprep.mubr.bf16.mxu0 0
        %729 = vmatmul.mubr.bf16.gmra.mrb[0].mxu0 %v666
        %v730 = vpop.f32.mrb[0].mxu0
        %v731 = vadd.f32 0.0, %v730
        %v732 = vpop.f32.mrb[0].mxu0
        %v733 = vadd.f32 0.0, %v732
        %v734 = vpop.f32.mrb[0].mxu0
        %v735 = vadd.f32 0.0, %v734
        %v736 = vpop.f32.mrb[0].mxu0
        %v737 = vadd.f32 0.0, %v736
        %738 = vmatprep.mubr.bf16.mxu0 0
        %739 = vmatmul.mubr.bf16.gmra.mrb[0].mxu0 %v669
        %v740 = vpop.f32.mrb[0].mxu0
        %v741 = vadd.f32 0.0, %v740
        %v742 = vpop.f32.mrb[0].mxu0
        %v743 = vadd.f32 0.0, %v742
        %v744 = vpop.f32.mrb[0].mxu0
        %v745 = vadd.f32 0.0, %v744
        %v746 = vpop.f32.mrb[0].mxu0
        %v747 = vadd.f32 0.0, %v746
        %748 = vdwg.mxu0
        %749 = vmatprep.subr.bf16.mxu0 %v637
        %750 = vmatpush1.bf16.msra.mxu0 %v636
        %751 = vmatprep.subr.bf16.mxu0 %v682
        %752 = vmatpush1.bf16.msra.mxu0 %v679
        %753 = vmatprep.subr.bf16.mxu0 0
        %754 = vmatpush1.bf16.msra.mxu0 0
        %755 = vmatprep.subr.bf16.mxu0 0
        %756 = vmatpush1.bf16.msra.mxu0 0
        %757 = vmatprep.subr.bf16.mxu0 0
        %758 = vmatpush1.bf16.msra.mxu0 0
        %759 = vmatprep.subr.bf16.mxu0 0
        %760 = vmatpush1.bf16.msra.mxu0 0
        %761 = vmatprep.subr.bf16.mxu0 0
        %762 = vmatpush1.bf16.msra.mxu0 0
        %763 = vmatprep.subr.bf16.mxu0 0
        %764 = vmatpush1.bf16.msra.mxu0 0
        %765 = vmatprep.subr.bf16.mxu0 0
        %766 = vmatpush1.bf16.msra.mxu0 0
        %767 = vmatprep.subr.bf16.mxu0 0
        %768 = vmatpush1.bf16.msra.mxu0 0
        %769 = vmatprep.subr.bf16.mxu0 0
        %770 = vmatpush1.bf16.msra.mxu0 0
        %771 = vmatprep.subr.bf16.mxu0 0
        %772 = vmatpush1.bf16.msra.mxu0 0
        %773 = vmatprep.subr.bf16.mxu0 0
        %774 = vmatpush1.bf16.msra.mxu0 0
        %775 = vmatprep.subr.bf16.mxu0 0
        %776 = vmatpush1.bf16.msra.mxu0 0
        %777 = vmatprep.subr.bf16.mxu0 0
        %778 = vmatpush1.bf16.msra.mxu0 0
        %779 = vmatprep.subr.bf16.mxu0 0
        %780 = vmatpush1.bf16.msra.mxu0 0
        %781 = vmatprep.mubr.bf16.mxu0 0
        %782 = vmatmul.mubr.bf16.gmra.mrb[0].mxu0 %v666
        %v783 = vpop.f32.mrb[0].mxu0
        %v784 = vadd.f32 0.0, %v783
        %v785 = vpop.f32.mrb[0].mxu0
        %v786 = vadd.f32 0.0, %v785
        %v787 = vpop.f32.mrb[0].mxu0
        %v788 = vadd.f32 0.0, %v787
        %v789 = vpop.f32.mrb[0].mxu0
        %v790 = vadd.f32 0.0, %v789
        %791 = vmatprep.mubr.bf16.mxu0 0
        %792 = vmatmul.mubr.bf16.gmra.mrb[0].mxu0 %v669
        %v793 = vpop.f32.mrb[0].mxu0
        %v794 = vadd.f32 0.0, %v793
        %v795 = vpop.f32.mrb[0].mxu0
        %v796 = vadd.f32 0.0, %v795
        %v797 = vpop.f32.mrb[0].mxu0
        %v798 = vadd.f32 0.0, %v797
        %v799 = vpop.f32.mrb[0].mxu0
        %v800 = vadd.f32 0.0, %v799
        %801 = vdwg.mxu0
        %802 = vmatprep.subr.bf16.mxu0 %v639
        %803 = vmatpush1.bf16.msra.mxu0 %v638
        %804 = vmatprep.subr.bf16.mxu0 %v688
        %805 = vmatpush1.bf16.msra.mxu0 %v685
        %806 = vmatprep.subr.bf16.mxu0 0
        %807 = vmatpush1.bf16.msra.mxu0 0
        %808 = vmatprep.subr.bf16.mxu0 0
        %809 = vmatpush1.bf16.msra.mxu0 0
        %810 = vmatprep.subr.bf16.mxu0 0
        %811 = vmatpush1.bf16.msra.mxu0 0
        %812 = vmatprep.subr.bf16.mxu0 0
        %813 = vmatpush1.bf16.msra.mxu0 0
        %814 = vmatprep.subr.bf16.mxu0 0
        %815 = vmatpush1.bf16.msra.mxu0 0
        %816 = vmatprep.subr.bf16.mxu0 0
        %817 = vmatpush1.bf16.msra.mxu0 0
        %818 = vmatprep.subr.bf16.mxu0 0
        %819 = vmatpush1.bf16.msra.mxu0 0
        %820 = vmatprep.subr.bf16.mxu0 0
        %821 = vmatpush1.bf16.msra.mxu0 0
        %822 = vmatprep.subr.bf16.mxu0 0
        %823 = vmatpush1.bf16.msra.mxu0 0
        %824 = vmatprep.subr.bf16.mxu0 0
        %825 = vmatpush1.bf16.msra.mxu0 0
        %826 = vmatprep.subr.bf16.mxu0 0
        %827 = vmatpush1.bf16.msra.mxu0 0
        %828 = vmatprep.subr.bf16.mxu0 0
        %829 = vmatpush1.bf16.msra.mxu0 0
        %830 = vmatprep.subr.bf16.mxu0 0
        %831 = vmatpush1.bf16.msra.mxu0 0
        %832 = vmatprep.subr.bf16.mxu0 0
        %833 = vmatpush1.bf16.msra.mxu0 0
        %834 = vmatprep.mubr.bf16.mxu0 0
        %835 = vmatmul.mubr.bf16.gmra.mrb[0].mxu0 %v666
        %v836 = vpop.f32.mrb[0].mxu0
        %v837 = vadd.f32 0.0, %v836
        %v838 = vpop.f32.mrb[0].mxu0
        %v839 = vadd.f32 0.0, %v838
        %v840 = vpop.f32.mrb[0].mxu0
        %v841 = vadd.f32 0.0, %v840
        %v842 = vpop.f32.mrb[0].mxu0
        %v843 = vadd.f32 0.0, %v842
        %844 = vmatprep.mubr.bf16.mxu0 0
        %845 = vmatmul.mubr.bf16.gmra.mrb[0].mxu0 %v669
        %v846 = vpop.f32.mrb[0].mxu0
        %v847 = vadd.f32 0.0, %v846
        %v848 = vpop.f32.mrb[0].mxu0
        %v849 = vadd.f32 0.0, %v848
        %v850 = vpop.f32.mrb[0].mxu0
        %v851 = vadd.f32 0.0, %v850
        %v852 = vpop.f32.mrb[0].mxu0
        %v853 = vadd.f32 0.0, %v852
        %854 = vdwg.mxu0
        %855 = vmatprep.subr.bf16.mxu0 %v641
        %856 = vmatpush1.bf16.msra.mxu0 %v640
        %857 = vmatprep.subr.bf16.mxu0 %v694
        %858 = vmatpush1.bf16.msra.mxu0 %v691
        %859 = vmatprep.subr.bf16.mxu0 0
        %860 = vmatpush1.bf16.msra.mxu0 0
        %861 = vmatprep.subr.bf16.mxu0 0
        %862 = vmatpush1.bf16.msra.mxu0 0
        %863 = vmatprep.subr.bf16.mxu0 0
        %864 = vmatpush1.bf16.msra.mxu0 0
        %865 = vmatprep.subr.bf16.mxu0 0
        %866 = vmatpush1.bf16.msra.mxu0 0
        %867 = vmatprep.subr.bf16.mxu0 0
        %868 = vmatpush1.bf16.msra.mxu0 0
        %869 = vmatprep.subr.bf16.mxu0 0
        %870 = vmatpush1.bf16.msra.mxu0 0
        %871 = vmatprep.subr.bf16.mxu0 0
        %872 = vmatpush1.bf16.msra.mxu0 0
        %873 = vmatprep.subr.bf16.mxu0 0
        %874 = vmatpush1.bf16.msra.mxu0 0
        %875 = vmatprep.subr.bf16.mxu0 0
        %876 = vmatpush1.bf16.msra.mxu0 0
        %877 = vmatprep.subr.bf16.mxu0 0
        %878 = vmatpush1.bf16.msra.mxu0 0
        %879 = vmatprep.subr.bf16.mxu0 0
        %880 = vmatpush1.bf16.msra.mxu0 0
        %881 = vmatprep.subr.bf16.mxu0 0
        %882 = vmatpush1.bf16.msra.mxu0 0
        %883 = vmatprep.subr.bf16.mxu0 0
        %884 = vmatpush1.bf16.msra.mxu0 0
        %885 = vmatprep.subr.bf16.mxu0 0
        %886 = vmatpush1.bf16.msra.mxu0 0
        %887 = vmatprep.mubr.bf16.mxu0 0
        %888 = vmatmul.mubr.bf16.gmra.mrb[0].mxu0 %v666
        %v889 = vpop.f32.mrb[0].mxu0
        %v890 = vadd.f32 0.0, %v889
        %v891 = vpop.f32.mrb[0].mxu0
        %v892 = vadd.f32 0.0, %v891
        %v893 = vpop.f32.mrb[0].mxu0
        %v894 = vadd.f32 0.0, %v893
        %v895 = vpop.f32.mrb[0].mxu0
        %v896 = vadd.f32 0.0, %v895
        %897 = vmatprep.mubr.bf16.mxu0 0
        %898 = vmatmul.mubr.bf16.gmra.mrb[0].mxu0 %v669
        %v899 = vpop.f32.mrb[0].mxu0
        %v900 = vadd.f32 0.0, %v899
        %v901 = vpop.f32.mrb[0].mxu0
        %v902 = vadd.f32 0.0, %v901
        %v903 = vpop.f32.mrb[0].mxu0
        %v904 = vadd.f32 0.0, %v903
        %v905 = vpop.f32.mrb[0].mxu0
        %v906 = vadd.f32 0.0, %v905
        %907 = vdwg.mxu0
        %v912 = vunpack.c.l.b16 %v549
        %v913 = vunpack.c.l.b16 %v550
        %v914 = vunpack.c.l.b16 %v551
        %v915 = vunpack.c.l.b16 %v552
        %v916 = vpack.c.b16 %v913, %v912
        %v917 = vpack.c.b16 %v915, %v914
        %v919 = vsel %vm664, %v916, 0
        %v922 = vsel %vm664, %v917, 0
        %v925 = vsel %vm671, %v541, 0
        %v928 = vsel %vm671, %v542, 0
        %v931 = vsel %vm671, %v543, 0
        %v934 = vsel %vm671, %v544, 0
        %v937 = vsel %vm671, %v545, 0
        %v940 = vsel %vm671, %v546, 0
        %v943 = vsel %vm671, %v547, 0
        %v946 = vsel %vm671, %v548, 0
        %948 = vmatprep.subr.bf16.mxu0 %v534
        %949 = vmatpush1.bf16.msra.mxu0 %v533
        %950 = vmatprep.subr.bf16.mxu0 %v928
        %951 = vmatpush1.bf16.msra.mxu0 %v925
        %952 = vmatprep.subr.bf16.mxu0 0
        %953 = vmatpush1.bf16.msra.mxu0 0
        %954 = vmatprep.subr.bf16.mxu0 0
        %955 = vmatpush1.bf16.msra.mxu0 0
        %956 = vmatprep.subr.bf16.mxu0 0
        %957 = vmatpush1.bf16.msra.mxu0 0
        %958 = vmatprep.subr.bf16.mxu0 0
        %959 = vmatpush1.bf16.msra.mxu0 0
        %960 = vmatprep.subr.bf16.mxu0 0
        %961 = vmatpush1.bf16.msra.mxu0 0
        %962 = vmatprep.subr.bf16.mxu0 0
        %963 = vmatpush1.bf16.msra.mxu0 0
        %964 = vmatprep.subr.bf16.mxu0 0
        %965 = vmatpush1.bf16.msra.mxu0 0
        %966 = vmatprep.subr.bf16.mxu0 0
        %967 = vmatpush1.bf16.msra.mxu0 0
        %968 = vmatprep.subr.bf16.mxu0 0
        %969 = vmatpush1.bf16.msra.mxu0 0
        %970 = vmatprep.subr.bf16.mxu0 0
        %971 = vmatpush1.bf16.msra.mxu0 0
        %972 = vmatprep.subr.bf16.mxu0 0
        %973 = vmatpush1.bf16.msra.mxu0 0
        %974 = vmatprep.subr.bf16.mxu0 0
        %975 = vmatpush1.bf16.msra.mxu0 0
        %976 = vmatprep.subr.bf16.mxu0 0
        %977 = vmatpush1.bf16.msra.mxu0 0
        %978 = vmatprep.subr.bf16.mxu0 0
        %979 = vmatpush1.bf16.msra.mxu0 0
        %980 = vmatprep.mubr.bf16.mxu0 0
        %981 = vmatmul.mubr.bf16.gmra.mrb[0].mxu0 %v919
        %v982 = vpop.f32.mrb[0].mxu0
        %v983 = vadd.f32 %v731, %v982
        %v984 = vpop.f32.mrb[0].mxu0
        %v985 = vadd.f32 %v733, %v984
        %v986 = vpop.f32.mrb[0].mxu0
        %v987 = vadd.f32 %v735, %v986
        %v988 = vpop.f32.mrb[0].mxu0
        %v989 = vadd.f32 %v737, %v988
        %990 = vmatprep.mubr.bf16.mxu0 0
        %991 = vmatmul.mubr.bf16.gmra.mrb[0].mxu0 %v922
        %v992 = vpop.f32.mrb[0].mxu0
        %v993 = vadd.f32 %v741, %v992
        %v994 = vpop.f32.mrb[0].mxu0
        %v995 = vadd.f32 %v743, %v994
        %v996 = vpop.f32.mrb[0].mxu0
        %v997 = vadd.f32 %v745, %v996
        %v998 = vpop.f32.mrb[0].mxu0
        %v999 = vadd.f32 %v747, %v998
        %1000 = vdwg.mxu0
        %1001 = vmatprep.subr.bf16.mxu0 %v536
        %1002 = vmatpush1.bf16.msra.mxu0 %v535
        %1003 = vmatprep.subr.bf16.mxu0 %v934
        %1004 = vmatpush1.bf16.msra.mxu0 %v931
        %1005 = vmatprep.subr.bf16.mxu0 0
        %1006 = vmatpush1.bf16.msra.mxu0 0
        %1007 = vmatprep.subr.bf16.mxu0 0
        %1008 = vmatpush1.bf16.msra.mxu0 0
        %1009 = vmatprep.subr.bf16.mxu0 0
        %1010 = vmatpush1.bf16.msra.mxu0 0
        %1011 = vmatprep.subr.bf16.mxu0 0
        %1012 = vmatpush1.bf16.msra.mxu0 0
        %1013 = vmatprep.subr.bf16.mxu0 0
        %1014 = vmatpush1.bf16.msra.mxu0 0
        %1015 = vmatprep.subr.bf16.mxu0 0
        %1016 = vmatpush1.bf16.msra.mxu0 0
        %1017 = vmatprep.subr.bf16.mxu0 0
        %1018 = vmatpush1.bf16.msra.mxu0 0
        %1019 = vmatprep.subr.bf16.mxu0 0
        %1020 = vmatpush1.bf16.msra.mxu0 0
        %1021 = vmatprep.subr.bf16.mxu0 0
        %1022 = vmatpush1.bf16.msra.mxu0 0
        %1023 = vmatprep.subr.bf16.mxu0 0
        %1024 = vmatpush1.bf16.msra.mxu0 0
        %1025 = vmatprep.subr.bf16.mxu0 0
        %1026 = vmatpush1.bf16.msra.mxu0 0
        %1027 = vmatprep.subr.bf16.mxu0 0
        %1028 = vmatpush1.bf16.msra.mxu0 0
        %1029 = vmatprep.subr.bf16.mxu0 0
        %1030 = vmatpush1.bf16.msra.mxu0 0
        %1031 = vmatprep.subr.bf16.mxu0 0
        %1032 = vmatpush1.bf16.msra.mxu0 0
        %1033 = vmatprep.mubr.bf16.mxu0 0
        %1034 = vmatmul.mubr.bf16.gmra.mrb[0].mxu0 %v919
        %v1035 = vpop.f32.mrb[0].mxu0
        %v1036 = vadd.f32 %v784, %v1035
        %v1037 = vpop.f32.mrb[0].mxu0
        %v1038 = vadd.f32 %v786, %v1037
        %v1039 = vpop.f32.mrb[0].mxu0
        %v1040 = vadd.f32 %v788, %v1039
        %v1041 = vpop.f32.mrb[0].mxu0
        %v1042 = vadd.f32 %v790, %v1041
        %1043 = vmatprep.mubr.bf16.mxu0 0
        %1044 = vmatmul.mubr.bf16.gmra.mrb[0].mxu0 %v922
        %v1045 = vpop.f32.mrb[0].mxu0
        %v1046 = vadd.f32 %v794, %v1045
        %v1047 = vpop.f32.mrb[0].mxu0
        %v1048 = vadd.f32 %v796, %v1047
        %v1049 = vpop.f32.mrb[0].mxu0
        %v1050 = vadd.f32 %v798, %v1049
        %v1051 = vpop.f32.mrb[0].mxu0
        %v1052 = vadd.f32 %v800, %v1051
        %1053 = vdwg.mxu0
        %1054 = vmatprep.subr.bf16.mxu0 %v538
        %1055 = vmatpush1.bf16.msra.mxu0 %v537
        %1056 = vmatprep.subr.bf16.mxu0 %v940
        %1057 = vmatpush1.bf16.msra.mxu0 %v937
        %1058 = vmatprep.subr.bf16.mxu0 0
        %1059 = vmatpush1.bf16.msra.mxu0 0
        %1060 = vmatprep.subr.bf16.mxu0 0
        %1061 = vmatpush1.bf16.msra.mxu0 0
        %1062 = vmatprep.subr.bf16.mxu0 0
        %1063 = vmatpush1.bf16.msra.mxu0 0
        %1064 = vmatprep.subr.bf16.mxu0 0
        %1065 = vmatpush1.bf16.msra.mxu0 0
        %1066 = vmatprep.subr.bf16.mxu0 0
        %1067 = vmatpush1.bf16.msra.mxu0 0
        %1068 = vmatprep.subr.bf16.mxu0 0
        %1069 = vmatpush1.bf16.msra.mxu0 0
        %1070 = vmatprep.subr.bf16.mxu0 0
        %1071 = vmatpush1.bf16.msra.mxu0 0
        %1072 = vmatprep.subr.bf16.mxu0 0
        %1073 = vmatpush1.bf16.msra.mxu0 0
        %1074 = vmatprep.subr.bf16.mxu0 0
        %1075 = vmatpush1.bf16.msra.mxu0 0
        %1076 = vmatprep.subr.bf16.mxu0 0
        %1077 = vmatpush1.bf16.msra.mxu0 0
        %1078 = vmatprep.subr.bf16.mxu0 0
        %1079 = vmatpush1.bf16.msra.mxu0 0
        %1080 = vmatprep.subr.bf16.mxu0 0
        %1081 = vmatpush1.bf16.msra.mxu0 0
        %1082 = vmatprep.subr.bf16.mxu0 0
        %1083 = vmatpush1.bf16.msra.mxu0 0
        %1084 = vmatprep.subr.bf16.mxu0 0
        %1085 = vmatpush1.bf16.msra.mxu0 0
        %1086 = vmatprep.mubr.bf16.mxu0 0
        %1087 = vmatmul.mubr.bf16.gmra.mrb[0].mxu0 %v919
        %v1088 = vpop.f32.mrb[0].mxu0
        %v1089 = vadd.f32 %v837, %v1088
        %v1090 = vpop.f32.mrb[0].mxu0
        %v1091 = vadd.f32 %v839, %v1090
        %v1092 = vpop.f32.mrb[0].mxu0
        %v1093 = vadd.f32 %v841, %v1092
        %v1094 = vpop.f32.mrb[0].mxu0
        %v1095 = vadd.f32 %v843, %v1094
        %1096 = vmatprep.mubr.bf16.mxu0 0
        %1097 = vmatmul.mubr.bf16.gmra.mrb[0].mxu0 %v922
        %v1098 = vpop.f32.mrb[0].mxu0
        %v1099 = vadd.f32 %v847, %v1098
        %v1100 = vpop.f32.mrb[0].mxu0
        %v1101 = vadd.f32 %v849, %v1100
        %v1102 = vpop.f32.mrb[0].mxu0
        %v1103 = vadd.f32 %v851, %v1102
        %v1104 = vpop.f32.mrb[0].mxu0
        %v1105 = vadd.f32 %v853, %v1104
        %1106 = vdwg.mxu0
        %1107 = vmatprep.subr.bf16.mxu0 %v540
        %1108 = vmatpush1.bf16.msra.mxu0 %v539
        %1109 = vmatprep.subr.bf16.mxu0 %v946
        %1110 = vmatpush1.bf16.msra.mxu0 %v943
        %1111 = vmatprep.subr.bf16.mxu0 0
        %1112 = vmatpush1.bf16.msra.mxu0 0
        %1113 = vmatprep.subr.bf16.mxu0 0
        %1114 = vmatpush1.bf16.msra.mxu0 0
        %1115 = vmatprep.subr.bf16.mxu0 0
        %1116 = vmatpush1.bf16.msra.mxu0 0
        %1117 = vmatprep.subr.bf16.mxu0 0
        %1118 = vmatpush1.bf16.msra.mxu0 0
        %1119 = vmatprep.subr.bf16.mxu0 0
        %1120 = vmatpush1.bf16.msra.mxu0 0
        %1121 = vmatprep.subr.bf16.mxu0 0
        %1122 = vmatpush1.bf16.msra.mxu0 0
        %1123 = vmatprep.subr.bf16.mxu0 0
        %1124 = vmatpush1.bf16.msra.mxu0 0
        %1125 = vmatprep.subr.bf16.mxu0 0
        %1126 = vmatpush1.bf16.msra.mxu0 0
        %1127 = vmatprep.subr.bf16.mxu0 0
        %1128 = vmatpush1.bf16.msra.mxu0 0
        %1129 = vmatprep.subr.bf16.mxu0 0
        %1130 = vmatpush1.bf16.msra.mxu0 0
        %1131 = vmatprep.subr.bf16.mxu0 0
        %1132 = vmatpush1.bf16.msra.mxu0 0
        %1133 = vmatprep.subr.bf16.mxu0 0
        %1134 = vmatpush1.bf16.msra.mxu0 0
        %1135 = vmatprep.subr.bf16.mxu0 0
        %1136 = vmatpush1.bf16.msra.mxu0 0
        %1137 = vmatprep.subr.bf16.mxu0 0
        %1138 = vmatpush1.bf16.msra.mxu0 0
        %1139 = vmatprep.mubr.bf16.mxu0 0
        %1140 = vmatmul.mubr.bf16.gmra.mrb[0].mxu0 %v919
        %v1141 = vpop.f32.mrb[0].mxu0
        %v1142 = vadd.f32 %v890, %v1141
        %v1143 = vpop.f32.mrb[0].mxu0
        %v1144 = vadd.f32 %v892, %v1143
        %v1145 = vpop.f32.mrb[0].mxu0
        %v1146 = vadd.f32 %v894, %v1145
        %v1147 = vpop.f32.mrb[0].mxu0
        %v1148 = vadd.f32 %v896, %v1147
        %1149 = vmatprep.mubr.bf16.mxu0 0
        %1150 = vmatmul.mubr.bf16.gmra.mrb[0].mxu0 %v922
        %v1151 = vpop.f32.mrb[0].mxu0
        %v1152 = vadd.f32 %v900, %v1151
        %v1153 = vpop.f32.mrb[0].mxu0
        %v1154 = vadd.f32 %v902, %v1153
        %v1155 = vpop.f32.mrb[0].mxu0
        %v1156 = vadd.f32 %v904, %v1155
        %v1157 = vpop.f32.mrb[0].mxu0
        %v1158 = vadd.f32 %v906, %v1157
        %1159 = vdwg.mxu0
        %v1160 = vld [vmem:[%s5] sm:$0xf]
        %v1161 = vld [vmem:[%s5 + $0x4] sm:$0xf]
        %v1162 = vld [vmem:[%s5 + $0x8] sm:$0xf]
        %v1163 = vld [vmem:[%s5 + $0xc] sm:$0xf]
        %v1164 = vld [vmem:[%s440] sm:$0xff]
        %v1165 = vld [vmem:[%s440 + $0x8] sm:$0xff]
        %v1166 = vld [vmem:[%s440 + $0x10] sm:$0xff]
        %v1167 = vld [vmem:[%s440 + $0x18] sm:$0xff]
        %v1168 = vld [vmem:[%s440 + $0x20] sm:$0xff]
        %v1169 = vld [vmem:[%s440 + $0x28] sm:$0xff]
        %v1170 = vld [vmem:[%s440 + $0x30] sm:$0xff]
        %v1171 = vld [vmem:[%s440 + $0x38] sm:$0xff]
        %v1172 = vld [vmem:[%s440 + $0x40] sm:$0xff]
        %v1173 = vld [vmem:[%s440 + $0x48] sm:$0xff]
        %v1174 = vld [vmem:[%s440 + $0x50] sm:$0xff]
        %v1175 = vld [vmem:[%s440 + $0x58] sm:$0xff]
        %v1176 = vld [vmem:[%s440 + $0x60] sm:$0xff]
        %v1177 = vld [vmem:[%s440 + $0x68] sm:$0xff]
        %v1178 = vld [vmem:[%s440 + $0x70] sm:$0xff]
        %v1179 = vld [vmem:[%s440 + $0x78] sm:$0xff]
        %v1180 = vld [vmem:[%s440 + $0x80] sm:$0xff]
        %v1181 = vld [vmem:[%s440 + $0x88] sm:$0xff]
        %v1182 = vld [vmem:[%s440 + $0x90] sm:$0xff]
        %v1183 = vld [vmem:[%s440 + $0x98] sm:$0xff]
        %v1184 = vld [vmem:[%s440 + $0xa0] sm:$0xff]
        %v1185 = vld [vmem:[%s440 + $0xa8] sm:$0xff]
        %v1186 = vld [vmem:[%s440 + $0xb0] sm:$0xff]
        %v1187 = vld [vmem:[%s440 + $0xb8] sm:$0xff]
        %v1188 = vld [vmem:[%s440 + $0xc0] sm:$0xff]
        %v1189 = vld [vmem:[%s440 + $0xc8] sm:$0xff]
        %v1190 = vld [vmem:[%s440 + $0xd0] sm:$0xff]
        %v1191 = vld [vmem:[%s440 + $0xd8] sm:$0xff]
        %v1192 = vld [vmem:[%s440 + $0xe0] sm:$0xff]
        %v1193 = vld [vmem:[%s440 + $0xe8] sm:$0xff]
        %v1194 = vld [vmem:[%s440 + $0xf0] sm:$0xff]
        %v1195 = vld [vmem:[%s440 + $0xf8] sm:$0xff]
        %v1196 = vld [vmem:[%s440 + $0x100] sm:$0xff]
        %v1197 = vld [vmem:[%s440 + $0x108] sm:$0xff]
        %v1198 = vld [vmem:[%s440 + $0x110] sm:$0xff]
        %v1199 = vld [vmem:[%s440 + $0x118] sm:$0xff]
        %v1200 = vld [vmem:[%s440 + $0x120] sm:$0xff]
        %v1201 = vld [vmem:[%s440 + $0x128] sm:$0xff]
        %v1202 = vld [vmem:[%s440 + $0x130] sm:$0xff]
        %v1203 = vld [vmem:[%s440 + $0x138] sm:$0xff]
        %v1204 = vld [vmem:[%s440 + $0x140] sm:$0xff]
        %v1205 = vld [vmem:[%s440 + $0x148] sm:$0xff]
        %v1206 = vld [vmem:[%s440 + $0x150] sm:$0xff]
        %v1207 = vld [vmem:[%s440 + $0x158] sm:$0xff]
        %v1208 = vld [vmem:[%s440 + $0x160] sm:$0xff]
        %v1209 = vld [vmem:[%s440 + $0x168] sm:$0xff]
        %v1210 = vld [vmem:[%s440 + $0x170] sm:$0xff]
        %v1211 = vld [vmem:[%s440 + $0x178] sm:$0xff]
        %v1212 = vld [vmem:[%s440 + $0x180] sm:$0xff]
        %v1213 = vld [vmem:[%s440 + $0x188] sm:$0xff]
        %v1214 = vld [vmem:[%s440 + $0x190] sm:$0xff]
        %v1215 = vld [vmem:[%s440 + $0x198] sm:$0xff]
        %v1216 = vld [vmem:[%s440 + $0x1a0] sm:$0xff]
        %v1217 = vld [vmem:[%s440 + $0x1a8] sm:$0xff]
        %v1218 = vld [vmem:[%s440 + $0x1b0] sm:$0xff]
        %v1219 = vld [vmem:[%s440 + $0x1b8] sm:$0xff]
        %v1220 = vld [vmem:[%s440 + $0x1c0] sm:$0xff]
        %v1221 = vld [vmem:[%s440 + $0x1c8] sm:$0xff]
        %v1222 = vld [vmem:[%s440 + $0x1d0] sm:$0xff]
        %v1223 = vld [vmem:[%s440 + $0x1d8] sm:$0xff]
        %v1224 = vld [vmem:[%s440 + $0x1e0] sm:$0xff]
        %v1225 = vld [vmem:[%s440 + $0x1e8] sm:$0xff]
        %v1226 = vld [vmem:[%s440 + $0x1f0] sm:$0xff]
        %v1227 = vld [vmem:[%s440 + $0x1f8] sm:$0xff]
        %v1228 = vld [vmem:[%s440 + $0x200] sm:$0xff]
        %v1229 = vld [vmem:[%s440 + $0x208] sm:$0xff]
        %v1230 = vld [vmem:[%s440 + $0x210] sm:$0xff]
        %v1231 = vld [vmem:[%s440 + $0x218] sm:$0xff]
        %v1232 = vld [vmem:[%s440 + $0x220] sm:$0xff]
        %v1233 = vld [vmem:[%s440 + $0x228] sm:$0xff]
        %v1234 = vld [vmem:[%s440 + $0x230] sm:$0xff]
        %v1235 = vld [vmem:[%s440 + $0x238] sm:$0xff]
        %v1236 = vld [vmem:[%s440 + $0x240] sm:$0xff]
        %v1237 = vld [vmem:[%s440 + $0x248] sm:$0xff]
        %v1238 = vld [vmem:[%s440 + $0x250] sm:$0xff]
        %v1239 = vld [vmem:[%s440 + $0x258] sm:$0xff]
        %v1240 = vld [vmem:[%s440 + $0x260] sm:$0xff]
        %v1241 = vld [vmem:[%s440 + $0x268] sm:$0xff]
        %v1242 = vld [vmem:[%s440 + $0x270] sm:$0xff]
        %v1243 = vld [vmem:[%s440 + $0x278] sm:$0xff]
        %v1244 = vld [vmem:[%s440 + $0x280] sm:$0xff]
        %v1245 = vld [vmem:[%s440 + $0x288] sm:$0xff]
        %v1246 = vld [vmem:[%s440 + $0x290] sm:$0xff]
        %v1247 = vld [vmem:[%s440 + $0x298] sm:$0xff]
        %v1248 = vld [vmem:[%s440 + $0x2a0] sm:$0xff]
        %v1249 = vld [vmem:[%s440 + $0x2a8] sm:$0xff]
        %v1250 = vld [vmem:[%s440 + $0x2b0] sm:$0xff]
        %v1251 = vld [vmem:[%s440 + $0x2b8] sm:$0xff]
        %v1252 = vld [vmem:[%s440 + $0x2c0] sm:$0xff]
        %v1253 = vld [vmem:[%s440 + $0x2c8] sm:$0xff]
        %v1254 = vld [vmem:[%s440 + $0x2d0] sm:$0xff]
        %v1255 = vld [vmem:[%s440 + $0x2d8] sm:$0xff]
        %v1256 = vld [vmem:[%s440 + $0x2e0] sm:$0xff]
        %v1257 = vld [vmem:[%s440 + $0x2e8] sm:$0xff]
        %v1258 = vld [vmem:[%s440 + $0x2f0] sm:$0xff]
        %v1259 = vld [vmem:[%s440 + $0x2f8] sm:$0xff]
        %v1260 = vld [vmem:[%s440 + $0x300] sm:$0xff]
        %v1261 = vld [vmem:[%s440 + $0x308] sm:$0xff]
        %v1262 = vld [vmem:[%s440 + $0x310] sm:$0xff]
        %v1263 = vld [vmem:[%s440 + $0x318] sm:$0xff]
        %v1264 = vld [vmem:[%s440 + $0x320] sm:$0xff]
        %v1265 = vld [vmem:[%s440 + $0x328] sm:$0xff]
        %v1266 = vld [vmem:[%s440 + $0x330] sm:$0xff]
        %v1267 = vld [vmem:[%s440 + $0x338] sm:$0xff]
        %v1268 = vld [vmem:[%s440 + $0x340] sm:$0xff]
        %v1269 = vld [vmem:[%s440 + $0x348] sm:$0xff]
        %v1270 = vld [vmem:[%s440 + $0x350] sm:$0xff]
        %v1271 = vld [vmem:[%s440 + $0x358] sm:$0xff]
        %v1272 = vld [vmem:[%s440 + $0x360] sm:$0xff]
        %v1273 = vld [vmem:[%s440 + $0x368] sm:$0xff]
        %v1274 = vld [vmem:[%s440 + $0x370] sm:$0xff]
        %v1275 = vld [vmem:[%s440 + $0x378] sm:$0xff]
        %v1276 = vld [vmem:[%s440 + $0x380] sm:$0xff]
        %v1277 = vld [vmem:[%s440 + $0x388] sm:$0xff]
        %v1278 = vld [vmem:[%s440 + $0x390] sm:$0xff]
        %v1279 = vld [vmem:[%s440 + $0x398] sm:$0xff]
        %v1280 = vld [vmem:[%s440 + $0x3a0] sm:$0xff]
        %v1281 = vld [vmem:[%s440 + $0x3a8] sm:$0xff]
        %v1282 = vld [vmem:[%s440 + $0x3b0] sm:$0xff]
        %v1283 = vld [vmem:[%s440 + $0x3b8] sm:$0xff]
        %v1284 = vld [vmem:[%s440 + $0x3c0] sm:$0xff]
        %v1285 = vld [vmem:[%s440 + $0x3c8] sm:$0xff]
        %v1286 = vld [vmem:[%s440 + $0x3d0] sm:$0xff]
        %v1287 = vld [vmem:[%s440 + $0x3d8] sm:$0xff]
        %v1288 = vld [vmem:[%s440 + $0x3e0] sm:$0xff]
        %v1289 = vld [vmem:[%s440 + $0x3e8] sm:$0xff]
        %v1290 = vld [vmem:[%s440 + $0x3f0] sm:$0xff]
        %v1291 = vld [vmem:[%s440 + $0x3f8] sm:$0xff]
        %v1292 = vpack.c.bf16 %v1165, %v1164
        %v1293 = vpack.c.bf16 %v1167, %v1166
        %v1294 = vpack.c.bf16 %v1169, %v1168
        %v1295 = vpack.c.bf16 %v1171, %v1170
        %v1296 = vpack.c.bf16 %v1173, %v1172
        %v1297 = vpack.c.bf16 %v1175, %v1174
        %v1298 = vpack.c.bf16 %v1177, %v1176
        %v1299 = vpack.c.bf16 %v1179, %v1178
        %v1300 = vpack.c.bf16 %v1181, %v1180
        %v1301 = vpack.c.bf16 %v1183, %v1182
        %v1302 = vpack.c.bf16 %v1185, %v1184
        %v1303 = vpack.c.bf16 %v1187, %v1186
        %v1304 = vpack.c.bf16 %v1189, %v1188
        %v1305 = vpack.c.bf16 %v1191, %v1190
        %v1306 = vpack.c.bf16 %v1193, %v1192
        %v1307 = vpack.c.bf16 %v1195, %v1194
        %v1308 = vpack.c.bf16 %v1197, %v1196
        %v1309 = vpack.c.bf16 %v1199, %v1198
        %v1310 = vpack.c.bf16 %v1201, %v1200
        %v1311 = vpack.c.bf16 %v1203, %v1202
        %v1312 = vpack.c.bf16 %v1205, %v1204
        %v1313 = vpack.c.bf16 %v1207, %v1206
        %v1314 = vpack.c.bf16 %v1209, %v1208
        %v1315 = vpack.c.bf16 %v1211, %v1210
        %v1316 = vpack.c.bf16 %v1213, %v1212
        %v1317 = vpack.c.bf16 %v1215, %v1214
        %v1318 = vpack.c.bf16 %v1217, %v1216
        %v1319 = vpack.c.bf16 %v1219, %v1218
        %v1320 = vpack.c.bf16 %v1221, %v1220
        %v1321 = vpack.c.bf16 %v1223, %v1222
        %v1322 = vpack.c.bf16 %v1225, %v1224
        %v1323 = vpack.c.bf16 %v1227, %v1226
        %v1324 = vpack.c.bf16 %v1229, %v1228
        %v1325 = vpack.c.bf16 %v1231, %v1230
        %v1326 = vpack.c.bf16 %v1233, %v1232
        %v1327 = vpack.c.bf16 %v1235, %v1234
        %v1328 = vpack.c.bf16 %v1237, %v1236
        %v1329 = vpack.c.bf16 %v1239, %v1238
        %v1330 = vpack.c.bf16 %v1241, %v1240
        %v1331 = vpack.c.bf16 %v1243, %v1242
        %v1332 = vpack.c.bf16 %v1245, %v1244
        %v1333 = vpack.c.bf16 %v1247, %v1246
        %v1334 = vpack.c.bf16 %v1249, %v1248
        %v1335 = vpack.c.bf16 %v1251, %v1250
        %v1336 = vpack.c.bf16 %v1253, %v1252
        %v1337 = vpack.c.bf16 %v1255, %v1254
        %v1338 = vpack.c.bf16 %v1257, %v1256
        %v1339 = vpack.c.bf16 %v1259, %v1258
        %v1340 = vpack.c.bf16 %v1261, %v1260
        %v1341 = vpack.c.bf16 %v1263, %v1262
        %v1342 = vpack.c.bf16 %v1265, %v1264
        %v1343 = vpack.c.bf16 %v1267, %v1266
        %v1344 = vpack.c.bf16 %v1269, %v1268
        %v1345 = vpack.c.bf16 %v1271, %v1270
        %v1346 = vpack.c.bf16 %v1273, %v1272
        %v1347 = vpack.c.bf16 %v1275, %v1274
        %v1348 = vpack.c.bf16 %v1277, %v1276
        %v1349 = vpack.c.bf16 %v1279, %v1278
        %v1350 = vpack.c.bf16 %v1281, %v1280
        %v1351 = vpack.c.bf16 %v1283, %v1282
        %v1352 = vpack.c.bf16 %v1285, %v1284
        %v1353 = vpack.c.bf16 %v1287, %v1286
        %v1354 = vpack.c.bf16 %v1289, %v1288
        %v1355 = vpack.c.bf16 %v1291, %v1290
        %v1360 = vunpack.c.l.b16 %v1160
        %v1361 = vunpack.c.l.b16 %v1161
        %v1362 = vunpack.c.l.b16 %v1162
        %v1363 = vunpack.c.l.b16 %v1163
        %v1364 = vpack.c.b16 %v1361, %v1360
        %v1365 = vpack.c.b16 %v1363, %v1362
        %vm1366 = vcmask 130048
        %v1368 = vsel %vm1366, %v1364, 0
        %v1371 = vsel %vm1366, %v1365, 0
        %v1374 = vsel %vm1366, %v1292, 0
        %v1377 = vsel %vm1366, %v1293, 0
        %v1380 = vsel %vm1366, %v1294, 0
        %v1383 = vsel %vm1366, %v1295, 0
        %v1386 = vsel %vm1366, %v1296, 0
        %v1389 = vsel %vm1366, %v1297, 0
        %v1392 = vsel %vm1366, %v1298, 0
        %v1395 = vsel %vm1366, %v1299, 0
        %v1398 = vsel %vm1366, %v1300, 0
        %v1401 = vsel %vm1366, %v1301, 0
        %v1404 = vsel %vm1366, %v1302, 0
        %v1407 = vsel %vm1366, %v1303, 0
        %v1410 = vsel %vm1366, %v1304, 0
        %v1413 = vsel %vm1366, %v1305, 0
        %v1416 = vsel %vm1366, %v1306, 0
        %v1419 = vsel %vm1366, %v1307, 0
        %v1422 = vsel %vm1366, %v1308, 0
        %v1425 = vsel %vm1366, %v1309, 0
        %v1428 = vsel %vm1366, %v1310, 0
        %v1431 = vsel %vm1366, %v1311, 0
        %v1434 = vsel %vm1366, %v1312, 0
        %v1437 = vsel %vm1366, %v1313, 0
        %v1440 = vsel %vm1366, %v1314, 0
        %v1443 = vsel %vm1366, %v1315, 0
        %v1446 = vsel %vm1366, %v1316, 0
        %v1449 = vsel %vm1366, %v1317, 0
        %v1452 = vsel %vm1366, %v1318, 0
        %v1455 = vsel %vm1366, %v1319, 0
        %v1458 = vsel %vm1366, %v1320, 0
        %v1461 = vsel %vm1366, %v1321, 0
        %v1464 = vsel %vm1366, %v1322, 0
        %v1467 = vsel %vm1366, %v1323, 0
        %v1470 = vsel %vm1366, %v1324, 0
        %v1473 = vsel %vm1366, %v1325, 0
        %v1476 = vsel %vm1366, %v1326, 0
        %v1479 = vsel %vm1366, %v1327, 0
        %v1482 = vsel %vm1366, %v1328, 0
        %v1485 = vsel %vm1366, %v1329, 0
        %v1488 = vsel %vm1366, %v1330, 0
        %v1491 = vsel %vm1366, %v1331, 0
        %v1494 = vsel %vm1366, %v1332, 0
        %v1497 = vsel %vm1366, %v1333, 0
        %v1500 = vsel %vm1366, %v1334, 0
        %v1503 = vsel %vm1366, %v1335, 0
        %v1506 = vsel %vm1366, %v1336, 0
        %v1509 = vsel %vm1366, %v1337, 0
        %v1512 = vsel %vm1366, %v1338, 0
        %v1515 = vsel %vm1366, %v1339, 0
        %v1518 = vsel %vm1366, %v1340, 0
        %v1521 = vsel %vm1366, %v1341, 0
        %v1524 = vsel %vm1366, %v1342, 0
        %v1527 = vsel %vm1366, %v1343, 0
        %v1530 = vsel %vm1366, %v1344, 0
        %v1533 = vsel %vm1366, %v1345, 0
        %v1536 = vsel %vm1366, %v1346, 0
        %v1539 = vsel %vm1366, %v1347, 0
        %v1542 = vsel %vm1366, %v1348, 0
        %v1545 = vsel %vm1366, %v1349, 0
        %v1548 = vsel %vm1366, %v1350, 0
        %v1551 = vsel %vm1366, %v1351, 0
        %v1554 = vsel %vm1366, %v1352, 0
        %v1557 = vsel %vm1366, %v1353, 0
        %v1560 = vsel %vm1366, %v1354, 0
        %v1563 = vsel %vm1366, %v1355, 0
        %1565 = vmatprep.subr.bf16.mxu0 0
        %1566 = vmatpush1.bf16.xpose.msra.mxu0 %v1374
        %1567 = vmatprep.subr.bf16.mxu0 0
        %1568 = vmatpush1.bf16.xpose.msra.mxu0 %v1377
        %1569 = vmatprep.subr.bf16.mxu0 0
        %1570 = vmatpush1.bf16.xpose.msra.mxu0 %v1380
        %1571 = vmatprep.subr.bf16.mxu0 0
        %1572 = vmatpush1.bf16.xpose.msra.mxu0 %v1383
        %1573 = vmatprep.subr.bf16.mxu0 0
        %1574 = vmatpush1.bf16.xpose.msra.mxu0 %v1386
        %1575 = vmatprep.subr.bf16.mxu0 0
        %1576 = vmatpush1.bf16.xpose.msra.mxu0 %v1389
        %1577 = vmatprep.subr.bf16.mxu0 0
        %1578 = vmatpush1.bf16.xpose.msra.mxu0 %v1392
        %1579 = vmatprep.subr.bf16.mxu0 0
        %1580 = vmatpush1.bf16.xpose.msra.mxu0 %v1395
        %1581 = vmatprep.subr.bf16.mxu0 0
        %1582 = vmatpush1.bf16.xpose.msra.mxu0 %v1398
        %1583 = vmatprep.subr.bf16.mxu0 0
        %1584 = vmatpush1.bf16.xpose.msra.mxu0 %v1401
        %1585 = vmatprep.subr.bf16.mxu0 0
        %1586 = vmatpush1.bf16.xpose.msra.mxu0 %v1404
        %1587 = vmatprep.subr.bf16.mxu0 0
        %1588 = vmatpush1.bf16.xpose.msra.mxu0 %v1407
        %1589 = vmatprep.subr.bf16.mxu0 0
        %1590 = vmatpush1.bf16.xpose.msra.mxu0 %v1410
        %1591 = vmatprep.subr.bf16.mxu0 0
        %1592 = vmatpush1.bf16.xpose.msra.mxu0 %v1413
        %1593 = vmatprep.subr.bf16.mxu0 0
        %1594 = vmatpush1.bf16.xpose.msra.mxu0 %v1416
        %1595 = vmatprep.subr.bf16.mxu0 0
        %1596 = vmatpush1.bf16.xpose.msra.mxu0 %v1419
        %1597 = vmatprep.mubr.bf16.mxu0 0
        %1598 = vmatmul.mubr.bf16.gmra.mrb[0].mxu0 %v1368
        %v1599 = vpop.f32.mrb[0].mxu0
        %v1600 = vadd.f32 0.0, %v1599
        %v1601 = vpop.f32.mrb[0].mxu0
        %v1602 = vadd.f32 0.0, %v1601
        %v1603 = vpop.f32.mrb[0].mxu0
        %v1604 = vadd.f32 0.0, %v1603
        %v1605 = vpop.f32.mrb[0].mxu0
        %v1606 = vadd.f32 0.0, %v1605
        %1607 = vmatprep.mubr.bf16.mxu0 0
        %1608 = vmatmul.mubr.bf16.gmra.mrb[0].mxu0 %v1371
        %v1609 = vpop.f32.mrb[0].mxu0
        %v1610 = vadd.f32 0.0, %v1609
        %v1611 = vpop.f32.mrb[0].mxu0
        %v1612 = vadd.f32 0.0, %v1611
        %v1613 = vpop.f32.mrb[0].mxu0
        %v1614 = vadd.f32 0.0, %v1613
        %v1615 = vpop.f32.mrb[0].mxu0
        %v1616 = vadd.f32 0.0, %v1615
        %1617 = vdwg.mxu0
        %1618 = vmatprep.subr.bf16.mxu0 0
        %1619 = vmatpush1.bf16.xpose.msra.mxu0 %v1422
        %1620 = vmatprep.subr.bf16.mxu0 0
        %1621 = vmatpush1.bf16.xpose.msra.mxu0 %v1425
        %1622 = vmatprep.subr.bf16.mxu0 0
        %1623 = vmatpush1.bf16.xpose.msra.mxu0 %v1428
        %1624 = vmatprep.subr.bf16.mxu0 0
        %1625 = vmatpush1.bf16.xpose.msra.mxu0 %v1431
        %1626 = vmatprep.subr.bf16.mxu0 0
        %1627 = vmatpush1.bf16.xpose.msra.mxu0 %v1434
        %1628 = vmatprep.subr.bf16.mxu0 0
        %1629 = vmatpush1.bf16.xpose.msra.mxu0 %v1437
        %1630 = vmatprep.subr.bf16.mxu0 0
        %1631 = vmatpush1.bf16.xpose.msra.mxu0 %v1440
        %1632 = vmatprep.subr.bf16.mxu0 0
        %1633 = vmatpush1.bf16.xpose.msra.mxu0 %v1443
        %1634 = vmatprep.subr.bf16.mxu0 0
        %1635 = vmatpush1.bf16.xpose.msra.mxu0 %v1446
        %1636 = vmatprep.subr.bf16.mxu0 0
        %1637 = vmatpush1.bf16.xpose.msra.mxu0 %v1449
        %1638 = vmatprep.subr.bf16.mxu0 0
        %1639 = vmatpush1.bf16.xpose.msra.mxu0 %v1452
        %1640 = vmatprep.subr.bf16.mxu0 0
        %1641 = vmatpush1.bf16.xpose.msra.mxu0 %v1455
        %1642 = vmatprep.subr.bf16.mxu0 0
        %1643 = vmatpush1.bf16.xpose.msra.mxu0 %v1458
        %1644 = vmatprep.subr.bf16.mxu0 0
        %1645 = vmatpush1.bf16.xpose.msra.mxu0 %v1461
        %1646 = vmatprep.subr.bf16.mxu0 0
        %1647 = vmatpush1.bf16.xpose.msra.mxu0 %v1464
        %1648 = vmatprep.subr.bf16.mxu0 0
        %1649 = vmatpush1.bf16.xpose.msra.mxu0 %v1467
        %1650 = vmatprep.mubr.bf16.mxu0 0
        %1651 = vmatmul.mubr.bf16.gmra.mrb[0].mxu0 %v1368
        %v1652 = vpop.f32.mrb[0].mxu0
        %v1653 = vadd.f32 0.0, %v1652
        %v1654 = vpop.f32.mrb[0].mxu0
        %v1655 = vadd.f32 0.0, %v1654
        %v1656 = vpop.f32.mrb[0].mxu0
        %v1657 = vadd.f32 0.0, %v1656
        %v1658 = vpop.f32.mrb[0].mxu0
        %v1659 = vadd.f32 0.0, %v1658
        %1660 = vmatprep.mubr.bf16.mxu0 0
        %1661 = vmatmul.mubr.bf16.gmra.mrb[0].mxu0 %v1371
        %v1662 = vpop.f32.mrb[0].mxu0
        %v1663 = vadd.f32 0.0, %v1662
        %v1664 = vpop.f32.mrb[0].mxu0
        %v1665 = vadd.f32 0.0, %v1664
        %v1666 = vpop.f32.mrb[0].mxu0
        %v1667 = vadd.f32 0.0, %v1666
        %v1668 = vpop.f32.mrb[0].mxu0
        %v1669 = vadd.f32 0.0, %v1668
        %1670 = vdwg.mxu0
        %1671 = vmatprep.subr.bf16.mxu0 0
        %1672 = vmatpush1.bf16.xpose.msra.mxu0 %v1470
        %1673 = vmatprep.subr.bf16.mxu0 0
        %1674 = vmatpush1.bf16.xpose.msra.mxu0 %v1473
        %1675 = vmatprep.subr.bf16.mxu0 0
        %1676 = vmatpush1.bf16.xpose.msra.mxu0 %v1476
        %1677 = vmatprep.subr.bf16.mxu0 0
        %1678 = vmatpush1.bf16.xpose.msra.mxu0 %v1479
        %1679 = vmatprep.subr.bf16.mxu0 0
        %1680 = vmatpush1.bf16.xpose.msra.mxu0 %v1482
        %1681 = vmatprep.subr.bf16.mxu0 0
        %1682 = vmatpush1.bf16.xpose.msra.mxu0 %v1485
        %1683 = vmatprep.subr.bf16.mxu0 0
        %1684 = vmatpush1.bf16.xpose.msra.mxu0 %v1488
        %1685 = vmatprep.subr.bf16.mxu0 0
        %1686 = vmatpush1.bf16.xpose.msra.mxu0 %v1491
        %1687 = vmatprep.subr.bf16.mxu0 0
        %1688 = vmatpush1.bf16.xpose.msra.mxu0 %v1494
        %1689 = vmatprep.subr.bf16.mxu0 0
        %1690 = vmatpush1.bf16.xpose.msra.mxu0 %v1497
        %1691 = vmatprep.subr.bf16.mxu0 0
        %1692 = vmatpush1.bf16.xpose.msra.mxu0 %v1500
        %1693 = vmatprep.subr.bf16.mxu0 0
        %1694 = vmatpush1.bf16.xpose.msra.mxu0 %v1503
        %1695 = vmatprep.subr.bf16.mxu0 0
        %1696 = vmatpush1.bf16.xpose.msra.mxu0 %v1506
        %1697 = vmatprep.subr.bf16.mxu0 0
        %1698 = vmatpush1.bf16.xpose.msra.mxu0 %v1509
        %1699 = vmatprep.subr.bf16.mxu0 0
        %1700 = vmatpush1.bf16.xpose.msra.mxu0 %v1512
        %1701 = vmatprep.subr.bf16.mxu0 0
        %1702 = vmatpush1.bf16.xpose.msra.mxu0 %v1515
        %1703 = vmatprep.mubr.bf16.mxu0 0
        %1704 = vmatmul.mubr.bf16.gmra.mrb[0].mxu0 %v1368
        %v1705 = vpop.f32.mrb[0].mxu0
        %v1706 = vadd.f32 0.0, %v1705
        %v1707 = vpop.f32.mrb[0].mxu0
        %v1708 = vadd.f32 0.0, %v1707
        %v1709 = vpop.f32.mrb[0].mxu0
        %v1710 = vadd.f32 0.0, %v1709
        %v1711 = vpop.f32.mrb[0].mxu0
        %v1712 = vadd.f32 0.0, %v1711
        %1713 = vmatprep.mubr.bf16.mxu0 0
        %1714 = vmatmul.mubr.bf16.gmra.mrb[0].mxu0 %v1371
        %v1715 = vpop.f32.mrb[0].mxu0
        %v1716 = vadd.f32 0.0, %v1715
        %v1717 = vpop.f32.mrb[0].mxu0
        %v1718 = vadd.f32 0.0, %v1717
        %v1719 = vpop.f32.mrb[0].mxu0
        %v1720 = vadd.f32 0.0, %v1719
        %v1721 = vpop.f32.mrb[0].mxu0
        %v1722 = vadd.f32 0.0, %v1721
        %1723 = vdwg.mxu0
        %1724 = vmatprep.subr.bf16.mxu0 0
        %1725 = vmatpush1.bf16.xpose.msra.mxu0 %v1518
        %1726 = vmatprep.subr.bf16.mxu0 0
        %1727 = vmatpush1.bf16.xpose.msra.mxu0 %v1521
        %1728 = vmatprep.subr.bf16.mxu0 0
        %1729 = vmatpush1.bf16.xpose.msra.mxu0 %v1524
        %1730 = vmatprep.subr.bf16.mxu0 0
        %1731 = vmatpush1.bf16.xpose.msra.mxu0 %v1527
        %1732 = vmatprep.subr.bf16.mxu0 0
        %1733 = vmatpush1.bf16.xpose.msra.mxu0 %v1530
        %1734 = vmatprep.subr.bf16.mxu0 0
        %1735 = vmatpush1.bf16.xpose.msra.mxu0 %v1533
        %1736 = vmatprep.subr.bf16.mxu0 0
        %1737 = vmatpush1.bf16.xpose.msra.mxu0 %v1536
        %1738 = vmatprep.subr.bf16.mxu0 0
        %1739 = vmatpush1.bf16.xpose.msra.mxu0 %v1539
        %1740 = vmatprep.subr.bf16.mxu0 0
        %1741 = vmatpush1.bf16.xpose.msra.mxu0 %v1542
        %1742 = vmatprep.subr.bf16.mxu0 0
        %1743 = vmatpush1.bf16.xpose.msra.mxu0 %v1545
        %1744 = vmatprep.subr.bf16.mxu0 0
        %1745 = vmatpush1.bf16.xpose.msra.mxu0 %v1548
        %1746 = vmatprep.subr.bf16.mxu0 0
        %1747 = vmatpush1.bf16.xpose.msra.mxu0 %v1551
        %1748 = vmatprep.subr.bf16.mxu0 0
        %1749 = vmatpush1.bf16.xpose.msra.mxu0 %v1554
        %1750 = vmatprep.subr.bf16.mxu0 0
        %1751 = vmatpush1.bf16.xpose.msra.mxu0 %v1557
        %1752 = vmatprep.subr.bf16.mxu0 0
        %1753 = vmatpush1.bf16.xpose.msra.mxu0 %v1560
        %1754 = vmatprep.subr.bf16.mxu0 0
        %1755 = vmatpush1.bf16.xpose.msra.mxu0 %v1563
        %1756 = vmatprep.mubr.bf16.mxu0 0
        %1757 = vmatmul.mubr.bf16.gmra.mrb[0].mxu0 %v1368
        %v1758 = vpop.f32.mrb[0].mxu0
        %v1759 = vadd.f32 0.0, %v1758
        %v1760 = vpop.f32.mrb[0].mxu0
        %v1761 = vadd.f32 0.0, %v1760
        %v1762 = vpop.f32.mrb[0].mxu0
        %v1763 = vadd.f32 0.0, %v1762
        %v1764 = vpop.f32.mrb[0].mxu0
        %v1765 = vadd.f32 0.0, %v1764
        %1766 = vmatprep.mubr.bf16.mxu0 0
        %1767 = vmatmul.mubr.bf16.gmra.mrb[0].mxu0 %v1371
        %v1768 = vpop.f32.mrb[0].mxu0
        %v1769 = vadd.f32 0.0, %v1768
        %v1770 = vpop.f32.mrb[0].mxu0
        %v1771 = vadd.f32 0.0, %v1770
        %v1772 = vpop.f32.mrb[0].mxu0
        %v1773 = vadd.f32 0.0, %v1772
        %v1774 = vpop.f32.mrb[0].mxu0
        %v1775 = vadd.f32 0.0, %v1774
        %1776 = vdwg.mxu0
        %v1777 = vadd.f32 %v983, %v1600
        %v1778 = vadd.f32 %v985, %v1602
        %v1779 = vadd.f32 %v1036, %v1653
        %v1780 = vadd.f32 %v1038, %v1655
        %v1781 = vadd.f32 %v1089, %v1706
        %v1782 = vadd.f32 %v1091, %v1708
        %v1783 = vadd.f32 %v1142, %v1759
        %v1784 = vadd.f32 %v1144, %v1761
        %v1785 = vadd.f32 %v987, %v1604
        %v1786 = vadd.f32 %v989, %v1606
        %v1787 = vadd.f32 %v1040, %v1657
        %v1788 = vadd.f32 %v1042, %v1659
        %v1789 = vadd.f32 %v1093, %v1710
        %v1790 = vadd.f32 %v1095, %v1712
        %v1791 = vadd.f32 %v1146, %v1763
        %v1792 = vadd.f32 %v1148, %v1765
        %v1793 = vadd.f32 %v993, %v1610
        %v1794 = vadd.f32 %v995, %v1612
        %v1795 = vadd.f32 %v1046, %v1663
        %v1796 = vadd.f32 %v1048, %v1665
        %v1797 = vadd.f32 %v1099, %v1716
        %v1798 = vadd.f32 %v1101, %v1718
        %v1799 = vadd.f32 %v1152, %v1769
        %v1800 = vadd.f32 %v1154, %v1771
        %v1801 = vadd.f32 %v997, %v1614
        %v1802 = vadd.f32 %v999, %v1616
        %v1803 = vadd.f32 %v1050, %v1667
        %v1804 = vadd.f32 %v1052, %v1669
        %v1805 = vadd.f32 %v1103, %v1720
        %v1806 = vadd.f32 %v1105, %v1722
        %v1807 = vadd.f32 %v1156, %v1773
        %v1808 = vadd.f32 %v1158, %v1775
        %v1809 = vld [vmem:[%s6] sm:$0xff]
        %v1810 = vld [vmem:[%s6 + $0x8] sm:$0xff]
        %v1811 = vld [vmem:[%s6 + $0x10] sm:$0xff]
        %v1812 = vld [vmem:[%s6 + $0x18] sm:$0xff]
        %v1813 = vld [vmem:[%s7] sm:$0xf]
        %v1814 = vld [vmem:[%s7 + $0x4] sm:$0xf]
        %v1815 = vld [vmem:[%s7 + $0x8] sm:$0xf]
        %v1816 = vld [vmem:[%s7 + $0xc] sm:$0xf]
        %v1817 = vld [vmem:[%s8] sm:$0xff]
        %v1818 = vld [vmem:[%s8 + $0x8] sm:$0xff]
        %v1819 = vld [vmem:[%s8 + $0x10] sm:$0xff]
        %v1820 = vld [vmem:[%s8 + $0x18] sm:$0xff]
        %v1821 = vld [vmem:[%s9] sm:$0xff]
        %v1822 = vld [vmem:[%s9 + $0x8] sm:$0xff]
        %v1823 = vld [vmem:[%s9 + $0x10] sm:$0xff]
        %v1824 = vld [vmem:[%s9 + $0x18] sm:$0xff]
        %s1825 = sld [smem:[#allocation2]]
        %1827 = vset.pattern.permute.xlu0 0
        %1828 = vperm.xlu0 %1827, %v1809
        %v1829 = vpop.permute.xlu0 %1828
        %1832 = vset.pattern.permute.xlu0 0
        %1833 = vperm.xlu0 %1832, %v1810
        %v1834 = vpop.permute.xlu0 %1833
        %1837 = vset.pattern.permute.xlu0 0
        %1838 = vperm.xlu0 %1837, %v1811
        %v1839 = vpop.permute.xlu0 %1838
        %1842 = vset.pattern.permute.xlu0 0
        %1843 = vperm.xlu0 %1842, %v1812
        %v1844 = vpop.permute.xlu0 %1843
        %v1846 = vadd.f32 %v1777, %v1829
        %v1847 = vadd.f32 %v1778, %v1829
        %v1848 = vadd.f32 %v1779, %v1829
        %v1849 = vadd.f32 %v1780, %v1829
        %v1850 = vadd.f32 %v1781, %v1829
        %v1851 = vadd.f32 %v1782, %v1829
        %v1852 = vadd.f32 %v1783, %v1829
        %v1853 = vadd.f32 %v1784, %v1829
        %v1854 = vadd.f32 %v1785, %v1834
        %v1855 = vadd.f32 %v1786, %v1834
        %v1856 = vadd.f32 %v1787, %v1834
        %v1857 = vadd.f32 %v1788, %v1834
        %v1858 = vadd.f32 %v1789, %v1834
        %v1859 = vadd.f32 %v1790, %v1834
        %v1860 = vadd.f32 %v1791, %v1834
        %v1861 = vadd.f32 %v1792, %v1834
        %v1862 = vadd.f32 %v1793, %v1839
        %v1863 = vadd.f32 %v1794, %v1839
        %v1864 = vadd.f32 %v1795, %v1839
        %v1865 = vadd.f32 %v1796, %v1839
        %v1866 = vadd.f32 %v1797, %v1839
        %v1867 = vadd.f32 %v1798, %v1839
        %v1868 = vadd.f32 %v1799, %v1839
        %v1869 = vadd.f32 %v1800, %v1839
        %v1870 = vadd.f32 %v1801, %v1844
        %v1871 = vadd.f32 %v1802, %v1844
        %v1872 = vadd.f32 %v1803, %v1844
        %v1873 = vadd.f32 %v1804, %v1844
        %v1874 = vadd.f32 %v1805, %v1844
        %v1875 = vadd.f32 %v1806, %v1844
        %v1876 = vadd.f32 %v1807, %v1844
        %v1877 = vadd.f32 %v1808, %v1844
        %v1878 = vmax.f32 %v1846, 0.0
        %v1879 = vmax.f32 %v1847, 0.0
        %v1880 = vmax.f32 %v1848, 0.0
        %v1881 = vmax.f32 %v1849, 0.0
        %v1882 = vmax.f32 %v1850, 0.0
        %v1883 = vmax.f32 %v1851, 0.0
        %v1884 = vmax.f32 %v1852, 0.0
        %v1885 = vmax.f32 %v1853, 0.0
        %v1886 = vmax.f32 %v1854, 0.0
        %v1887 = vmax.f32 %v1855, 0.0
        %v1888 = vmax.f32 %v1856, 0.0
        %v1889 = vmax.f32 %v1857, 0.0
        %v1890 = vmax.f32 %v1858, 0.0
        %v1891 = vmax.f32 %v1859, 0.0
        %v1892 = vmax.f32 %v1860, 0.0
        %v1893 = vmax.f32 %v1861, 0.0
        %v1894 = vmax.f32 %v1862, 0.0
        %v1895 = vmax.f32 %v1863, 0.0
        %v1896 = vmax.f32 %v1864, 0.0
        %v1897 = vmax.f32 %v1865, 0.0
        %v1898 = vmax.f32 %v1866, 0.0
        %v1899 = vmax.f32 %v1867, 0.0
        %v1900 = vmax.f32 %v1868, 0.0
        %v1901 = vmax.f32 %v1869, 0.0
        %v1902 = vmax.f32 %v1870, 0.0
        %v1903 = vmax.f32 %v1871, 0.0
        %v1904 = vmax.f32 %v1872, 0.0
        %v1905 = vmax.f32 %v1873, 0.0
        %v1906 = vmax.f32 %v1874, 0.0
        %v1907 = vmax.f32 %v1875, 0.0
        %v1908 = vmax.f32 %v1876, 0.0
        %v1909 = vmax.f32 %v1877, 0.0
        %v1910 = vpack.c.bf16 %v1886, %v1878
        %v1911 = vpack.c.bf16 %v1887, %v1879
        %v1912 = vpack.c.bf16 %v1888, %v1880
        %v1913 = vpack.c.bf16 %v1889, %v1881
        %v1914 = vpack.c.bf16 %v1890, %v1882
        %v1915 = vpack.c.bf16 %v1891, %v1883
        %v1916 = vpack.c.bf16 %v1892, %v1884
        %v1917 = vpack.c.bf16 %v1893, %v1885
        %v1918 = vpack.c.bf16 %v1902, %v1894
        %v1919 = vpack.c.bf16 %v1903, %v1895
        %v1920 = vpack.c.bf16 %v1904, %v1896
        %v1921 = vpack.c.bf16 %v1905, %v1897
        %v1922 = vpack.c.bf16 %v1906, %v1898
        %v1923 = vpack.c.bf16 %v1907, %v1899
        %v1924 = vpack.c.bf16 %v1908, %v1900
        %v1925 = vpack.c.bf16 %v1909, %v1901
        %1927 = vset.pattern.permute.xlu0 0
        %1928 = vperm.xlu0 %1927, %v1817
        %v1929 = vpop.permute.xlu0 %1928
        %1932 = vset.pattern.permute.xlu0 0
        %1933 = vperm.xlu0 %1932, %v1818
        %v1934 = vpop.permute.xlu0 %1933
        %1937 = vset.pattern.permute.xlu0 0
        %1938 = vperm.xlu0 %1937, %v1819
        %v1939 = vpop.permute.xlu0 %1938
        %1942 = vset.pattern.permute.xlu0 0
        %1943 = vperm.xlu0 %1942, %v1820
        %v1944 = vpop.permute.xlu0 %1943
        %v1950 = vunpack.c.l.b16 %v1813
        %v1951 = vunpack.c.l.b16 %v1814
        %v1952 = vunpack.c.l.b16 %v1815
        %v1953 = vunpack.c.l.b16 %v1816
        %v1954 = vpack.c.b16 %v1951, %v1950
        %v1955 = vpack.c.b16 %v1953, %v1952
        %vm1956 = vcmask 261120
        %v1958 = vsel %vm1956, %v1954, 0
        %v1961 = vsel %vm1956, %v1955, 0
        %1963 = vmatprep.subr.bf16.mxu0 %v1911
        %1964 = vmatpush1.bf16.msra.mxu0 %v1910
        %1965 = vmatprep.subr.bf16.mxu0 %v1919
        %1966 = vmatpush1.bf16.msra.mxu0 %v1918
        %1967 = vmatprep.subr.bf16.mxu0 0
        %1968 = vmatpush1.bf16.msra.mxu0 0
        %1969 = vmatprep.subr.bf16.mxu0 0
        %1970 = vmatpush1.bf16.msra.mxu0 0
        %1971 = vmatprep.subr.bf16.mxu0 0
        %1972 = vmatpush1.bf16.msra.mxu0 0
        %1973 = vmatprep.subr.bf16.mxu0 0
        %1974 = vmatpush1.bf16.msra.mxu0 0
        %1975 = vmatprep.subr.bf16.mxu0 0
        %1976 = vmatpush1.bf16.msra.mxu0 0
        %1977 = vmatprep.subr.bf16.mxu0 0
        %1978 = vmatpush1.bf16.msra.mxu0 0
        %1979 = vmatprep.subr.bf16.mxu0 0
        %1980 = vmatpush1.bf16.msra.mxu0 0
        %1981 = vmatprep.subr.bf16.mxu0 0
        %1982 = vmatpush1.bf16.msra.mxu0 0
        %1983 = vmatprep.subr.bf16.mxu0 0
        %1984 = vmatpush1.bf16.msra.mxu0 0
        %1985 = vmatprep.subr.bf16.mxu0 0
        %1986 = vmatpush1.bf16.msra.mxu0 0
        %1987 = vmatprep.subr.bf16.mxu0 0
        %1988 = vmatpush1.bf16.msra.mxu0 0
        %1989 = vmatprep.subr.bf16.mxu0 0
        %1990 = vmatpush1.bf16.msra.mxu0 0
        %1991 = vmatprep.subr.bf16.mxu0 0
        %1992 = vmatpush1.bf16.msra.mxu0 0
        %1993 = vmatprep.subr.bf16.mxu0 0
        %1994 = vmatpush1.bf16.msra.mxu0 0
        %1995 = vmatprep.mubr.bf16.mxu0 0
        %1996 = vmatmul.mubr.bf16.gmra.mrb[0].mxu0 %v1958
        %v1997 = vpop.f32.mrb[0].mxu0
        %v1998 = vadd.f32 %v1929, %v1997
        %v1999 = vpop.f32.mrb[0].mxu0
        %v2000 = vadd.f32 %v1929, %v1999
        %v2001 = vpop.f32.mrb[0].mxu0
        %v2002 = vadd.f32 %v1934, %v2001
        %v2003 = vpop.f32.mrb[0].mxu0
        %v2004 = vadd.f32 %v1934, %v2003
        %2005 = vmatprep.mubr.bf16.mxu0 0
        %2006 = vmatmul.mubr.bf16.gmra.mrb[0].mxu0 %v1961
        %v2007 = vpop.f32.mrb[0].mxu0
        %v2008 = vadd.f32 %v1939, %v2007
        %v2009 = vpop.f32.mrb[0].mxu0
        %v2010 = vadd.f32 %v1939, %v2009
        %v2011 = vpop.f32.mrb[0].mxu0
        %v2012 = vadd.f32 %v1944, %v2011
        %v2013 = vpop.f32.mrb[0].mxu0
        %v2014 = vadd.f32 %v1944, %v2013
        %2015 = vdwg.mxu0
        %2016 = vmatprep.subr.bf16.mxu0 %v1913
        %2017 = vmatpush1.bf16.msra.mxu0 %v1912
        %2018 = vmatprep.subr.bf16.mxu0 %v1921
        %2019 = vmatpush1.bf16.msra.mxu0 %v1920
        %2020 = vmatprep.subr.bf16.mxu0 0
        %2021 = vmatpush1.bf16.msra.mxu0 0
        %2022 = vmatprep.subr.bf16.mxu0 0
        %2023 = vmatpush1.bf16.msra.mxu0 0
        %2024 = vmatprep.subr.bf16.mxu0 0
        %2025 = vmatpush1.bf16.msra.mxu0 0
        %2026 = vmatprep.subr.bf16.mxu0 0
        %2027 = vmatpush1.bf16.msra.mxu0 0
        %2028 = vmatprep.subr.bf16.mxu0 0
        %2029 = vmatpush1.bf16.msra.mxu0 0
        %2030 = vmatprep.subr.bf16.mxu0 0
        %2031 = vmatpush1.bf16.msra.mxu0 0
        %2032 = vmatprep.subr.bf16.mxu0 0
        %2033 = vmatpush1.bf16.msra.mxu0 0
        %2034 = vmatprep.subr.bf16.mxu0 0
        %2035 = vmatpush1.bf16.msra.mxu0 0
        %2036 = vmatprep.subr.bf16.mxu0 0
        %2037 = vmatpush1.bf16.msra.mxu0 0
        %2038 = vmatprep.subr.bf16.mxu0 0
        %2039 = vmatpush1.bf16.msra.mxu0 0
        %2040 = vmatprep.subr.bf16.mxu0 0
        %2041 = vmatpush1.bf16.msra.mxu0 0
        %2042 = vmatprep.subr.bf16.mxu0 0
        %2043 = vmatpush1.bf16.msra.mxu0 0
        %2044 = vmatprep.subr.bf16.mxu0 0
        %2045 = vmatpush1.bf16.msra.mxu0 0
        %2046 = vmatprep.subr.bf16.mxu0 0
        %2047 = vmatpush1.bf16.msra.mxu0 0
        %2048 = vmatprep.mubr.bf16.mxu0 0
        %2049 = vmatmul.mubr.bf16.gmra.mrb[0].mxu0 %v1958
        %v2050 = vpop.f32.mrb[0].mxu0
        %v2051 = vadd.f32 %v1929, %v2050
        %v2052 = vpop.f32.mrb[0].mxu0
        %v2053 = vadd.f32 %v1929, %v2052
        %v2054 = vpop.f32.mrb[0].mxu0
        %v2055 = vadd.f32 %v1934, %v2054
        %v2056 = vpop.f32.mrb[0].mxu0
        %v2057 = vadd.f32 %v1934, %v2056
        %2058 = vmatprep.mubr.bf16.mxu0 0
        %2059 = vmatmul.mubr.bf16.gmra.mrb[0].mxu0 %v1961
        %v2060 = vpop.f32.mrb[0].mxu0
        %v2061 = vadd.f32 %v1939, %v2060
        %v2062 = vpop.f32.mrb[0].mxu0
        %v2063 = vadd.f32 %v1939, %v2062
        %v2064 = vpop.f32.mrb[0].mxu0
        %v2065 = vadd.f32 %v1944, %v2064
        %v2066 = vpop.f32.mrb[0].mxu0
        %v2067 = vadd.f32 %v1944, %v2066
        %2068 = vdwg.mxu0
        %2069 = vmatprep.subr.bf16.mxu0 %v1915
        %2070 = vmatpush1.bf16.msra.mxu0 %v1914
        %2071 = vmatprep.subr.bf16.mxu0 %v1923
        %2072 = vmatpush1.bf16.msra.mxu0 %v1922
        %2073 = vmatprep.subr.bf16.mxu0 0
        %2074 = vmatpush1.bf16.msra.mxu0 0
        %2075 = vmatprep.subr.bf16.mxu0 0
        %2076 = vmatpush1.bf16.msra.mxu0 0
        %2077 = vmatprep.subr.bf16.mxu0 0
        %2078 = vmatpush1.bf16.msra.mxu0 0
        %2079 = vmatprep.subr.bf16.mxu0 0
        %2080 = vmatpush1.bf16.msra.mxu0 0
        %2081 = vmatprep.subr.bf16.mxu0 0
        %2082 = vmatpush1.bf16.msra.mxu0 0
        %2083 = vmatprep.subr.bf16.mxu0 0
        %2084 = vmatpush1.bf16.msra.mxu0 0
        %2085 = vmatprep.subr.bf16.mxu0 0
        %2086 = vmatpush1.bf16.msra.mxu0 0
        %2087 = vmatprep.subr.bf16.mxu0 0
        %2088 = vmatpush1.bf16.msra.mxu0 0
        %2089 = vmatprep.subr.bf16.mxu0 0
        %2090 = vmatpush1.bf16.msra.mxu0 0
        %2091 = vmatprep.subr.bf16.mxu0 0
        %2092 = vmatpush1.bf16.msra.mxu0 0
        %2093 = vmatprep.subr.bf16.mxu0 0
        %2094 = vmatpush1.bf16.msra.mxu0 0
        %2095 = vmatprep.subr.bf16.mxu0 0
        %2096 = vmatpush1.bf16.msra.mxu0 0
        %2097 = vmatprep.subr.bf16.mxu0 0
        %2098 = vmatpush1.bf16.msra.mxu0 0
        %2099 = vmatprep.subr.bf16.mxu0 0
        %2100 = vmatpush1.bf16.msra.mxu0 0
        %2101 = vmatprep.mubr.bf16.mxu0 0
        %2102 = vmatmul.mubr.bf16.gmra.mrb[0].mxu0 %v1958
        %v2103 = vpop.f32.mrb[0].mxu0
        %v2104 = vadd.f32 %v1929, %v2103
        %v2105 = vpop.f32.mrb[0].mxu0
        %v2106 = vadd.f32 %v1929, %v2105
        %v2107 = vpop.f32.mrb[0].mxu0
        %v2108 = vadd.f32 %v1934, %v2107
        %v2109 = vpop.f32.mrb[0].mxu0
        %v2110 = vadd.f32 %v1934, %v2109
        %2111 = vmatprep.mubr.bf16.mxu0 0
        %2112 = vmatmul.mubr.bf16.gmra.mrb[0].mxu0 %v1961
        %v2113 = vpop.f32.mrb[0].mxu0
        %v2114 = vadd.f32 %v1939, %v2113
        %v2115 = vpop.f32.mrb[0].mxu0
        %v2116 = vadd.f32 %v1939, %v2115
        %v2117 = vpop.f32.mrb[0].mxu0
        %v2118 = vadd.f32 %v1944, %v2117
        %v2119 = vpop.f32.mrb[0].mxu0
        %v2120 = vadd.f32 %v1944, %v2119
        %2121 = vdwg.mxu0
        %2122 = vmatprep.subr.bf16.mxu0 %v1917
        %2123 = vmatpush1.bf16.msra.mxu0 %v1916
        %2124 = vmatprep.subr.bf16.mxu0 %v1925
        %2125 = vmatpush1.bf16.msra.mxu0 %v1924
        %2126 = vmatprep.subr.bf16.mxu0 0
        %2127 = vmatpush1.bf16.msra.mxu0 0
        %2128 = vmatprep.subr.bf16.mxu0 0
        %2129 = vmatpush1.bf16.msra.mxu0 0
        %2130 = vmatprep.subr.bf16.mxu0 0
        %2131 = vmatpush1.bf16.msra.mxu0 0
        %2132 = vmatprep.subr.bf16.mxu0 0
        %2133 = vmatpush1.bf16.msra.mxu0 0
        %2134 = vmatprep.subr.bf16.mxu0 0
        %2135 = vmatpush1.bf16.msra.mxu0 0
        %2136 = vmatprep.subr.bf16.mxu0 0
        %2137 = vmatpush1.bf16.msra.mxu0 0
        %2138 = vmatprep.subr.bf16.mxu0 0
        %2139 = vmatpush1.bf16.msra.mxu0 0
        %2140 = vmatprep.subr.bf16.mxu0 0
        %2141 = vmatpush1.bf16.msra.mxu0 0
        %2142 = vmatprep.subr.bf16.mxu0 0
        %2143 = vmatpush1.bf16.msra.mxu0 0
        %2144 = vmatprep.subr.bf16.mxu0 0
        %2145 = vmatpush1.bf16.msra.mxu0 0
        %2146 = vmatprep.subr.bf16.mxu0 0
        %2147 = vmatpush1.bf16.msra.mxu0 0
        %2148 = vmatprep.subr.bf16.mxu0 0
        %2149 = vmatpush1.bf16.msra.mxu0 0
        %2150 = vmatprep.subr.bf16.mxu0 0
        %2151 = vmatpush1.bf16.msra.mxu0 0
        %2152 = vmatprep.subr.bf16.mxu0 0
        %2153 = vmatpush1.bf16.msra.mxu0 0
        %2154 = vmatprep.mubr.bf16.mxu0 0
        %2155 = vmatmul.mubr.bf16.gmra.mrb[0].mxu0 %v1958
        %v2156 = vpop.f32.mrb[0].mxu0
        %v2157 = vadd.f32 %v1929, %v2156
        %v2158 = vpop.f32.mrb[0].mxu0
        %v2159 = vadd.f32 %v1929, %v2158
        %v2160 = vpop.f32.mrb[0].mxu0
        %v2161 = vadd.f32 %v1934, %v2160
        %v2162 = vpop.f32.mrb[0].mxu0
        %v2163 = vadd.f32 %v1934, %v2162
        %2164 = vmatprep.mubr.bf16.mxu0 0
        %2165 = vmatmul.mubr.bf16.gmra.mrb[0].mxu0 %v1961
        %v2166 = vpop.f32.mrb[0].mxu0
        %v2167 = vadd.f32 %v1939, %v2166
        %v2168 = vpop.f32.mrb[0].mxu0
        %v2169 = vadd.f32 %v1939, %v2168
        %v2170 = vpop.f32.mrb[0].mxu0
        %v2171 = vadd.f32 %v1944, %v2170
        %v2172 = vpop.f32.mrb[0].mxu0
        %v2173 = vadd.f32 %v1944, %v2172
        %2174 = vdwg.mxu0
        %v2175 = vmax.f32 %v1998, 0.0
        %v2176 = vmax.f32 %v2000, 0.0
        %v2177 = vmax.f32 %v2051, 0.0
        %v2178 = vmax.f32 %v2053, 0.0
        %v2179 = vmax.f32 %v2104, 0.0
        %v2180 = vmax.f32 %v2106, 0.0
        %v2181 = vmax.f32 %v2157, 0.0
        %v2182 = vmax.f32 %v2159, 0.0
        %v2183 = vmax.f32 %v2002, 0.0
        %v2184 = vmax.f32 %v2004, 0.0
        %v2185 = vmax.f32 %v2055, 0.0
        %v2186 = vmax.f32 %v2057, 0.0
        %v2187 = vmax.f32 %v2108, 0.0
        %v2188 = vmax.f32 %v2110, 0.0
        %v2189 = vmax.f32 %v2161, 0.0
        %v2190 = vmax.f32 %v2163, 0.0
        %v2191 = vmax.f32 %v2008, 0.0
        %v2192 = vmax.f32 %v2010, 0.0
        %v2193 = vmax.f32 %v2061, 0.0
        %v2194 = vmax.f32 %v2063, 0.0
        %v2195 = vmax.f32 %v2114, 0.0
        %v2196 = vmax.f32 %v2116, 0.0
        %v2197 = vmax.f32 %v2167, 0.0
        %v2198 = vmax.f32 %v2169, 0.0
        %v2199 = vmax.f32 %v2012, 0.0
        %v2200 = vmax.f32 %v2014, 0.0
        %v2201 = vmax.f32 %v2065, 0.0
        %v2202 = vmax.f32 %v2067, 0.0
        %v2203 = vmax.f32 %v2118, 0.0
        %v2204 = vmax.f32 %v2120, 0.0
        %v2205 = vmax.f32 %v2171, 0.0
        %v2206 = vmax.f32 %v2173, 0.0
        %2208 = vset.pattern.permute.xlu0 0
        %2209 = vperm.xlu0 %2208, %v1821
        %v2210 = vpop.permute.xlu0 %2209
        %2213 = vset.pattern.permute.xlu0 0
        %2214 = vperm.xlu0 %2213, %v1822
        %v2215 = vpop.permute.xlu0 %2214
        %2218 = vset.pattern.permute.xlu0 0
        %2219 = vperm.xlu0 %2218, %v1823
        %v2220 = vpop.permute.xlu0 %2219
        %2223 = vset.pattern.permute.xlu0 0
        %2224 = vperm.xlu0 %2223, %v1824
        %v2225 = vpop.permute.xlu0 %2224
        %v2227 = vmul.f32 %v2175, %v2210
        %v2228 = vmul.f32 %v2176, %v2210
        %v2229 = vmul.f32 %v2177, %v2210
        %v2230 = vmul.f32 %v2178, %v2210
        %v2231 = vmul.f32 %v2179, %v2210
        %v2232 = vmul.f32 %v2180, %v2210
        %v2233 = vmul.f32 %v2181, %v2210
        %v2234 = vmul.f32 %v2182, %v2210
        %v2235 = vmul.f32 %v2183, %v2215
        %v2236 = vmul.f32 %v2184, %v2215
        %v2237 = vmul.f32 %v2185, %v2215
        %v2238 = vmul.f32 %v2186, %v2215
        %v2239 = vmul.f32 %v2187, %v2215
        %v2240 = vmul.f32 %v2188, %v2215
        %v2241 = vmul.f32 %v2189, %v2215
        %v2242 = vmul.f32 %v2190, %v2215
        %v2243 = vmul.f32 %v2191, %v2220
        %v2244 = vmul.f32 %v2192, %v2220
        %v2245 = vmul.f32 %v2193, %v2220
        %v2246 = vmul.f32 %v2194, %v2220
        %v2247 = vmul.f32 %v2195, %v2220
        %v2248 = vmul.f32 %v2196, %v2220
        %v2249 = vmul.f32 %v2197, %v2220
        %v2250 = vmul.f32 %v2198, %v2220
        %v2251 = vmul.f32 %v2199, %v2225
        %v2252 = vmul.f32 %v2200, %v2225
        %v2253 = vmul.f32 %v2201, %v2225
        %v2254 = vmul.f32 %v2202, %v2225
        %v2255 = vmul.f32 %v2203, %v2225
        %v2256 = vmul.f32 %v2204, %v2225
        %v2257 = vmul.f32 %v2205, %v2225
        %v2258 = vmul.f32 %v2206, %v2225
        %v2259 = vadd.f32 %v2227, %v2235
        %v2260 = vadd.f32 %v2259, %v2243
        %v2261 = vadd.f32 %v2260, %v2251
        %v2262 = vrot.slane %v2261, 4
        %v2263 = vadd.f32 %v2261, %v2262
        %v2264 = vrot.slane %v2263, 2
        %v2265 = vadd.f32 %v2263, %v2264
        %v2266 = vrot.slane %v2265, 1
        %v2267 = vadd.f32 %v2265, %v2266
        %v2268 = vadd.f32 %v2228, %v2236
        %v2269 = vadd.f32 %v2268, %v2244
        %v2270 = vadd.f32 %v2269, %v2252
        %v2271 = vrot.slane %v2270, 4
        %v2272 = vadd.f32 %v2270, %v2271
        %v2273 = vrot.slane %v2272, 2
        %v2274 = vadd.f32 %v2272, %v2273
        %v2275 = vrot.slane %v2274, 1
        %v2276 = vadd.f32 %v2274, %v2275
        %v2277 = vadd.f32 %v2229, %v2237
        %v2278 = vadd.f32 %v2277, %v2245
        %v2279 = vadd.f32 %v2278, %v2253
        %v2280 = vrot.slane %v2279, 4
        %v2281 = vadd.f32 %v2279, %v2280
        %v2282 = vrot.slane %v2281, 2
        %v2283 = vadd.f32 %v2281, %v2282
        %v2284 = vrot.slane %v2283, 1
        %v2285 = vadd.f32 %v2283, %v2284
        %v2286 = vadd.f32 %v2230, %v2238
        %v2287 = vadd.f32 %v2286, %v2246
        %v2288 = vadd.f32 %v2287, %v2254
        %v2289 = vrot.slane %v2288, 4
        %v2290 = vadd.f32 %v2288, %v2289
        %v2291 = vrot.slane %v2290, 2
        %v2292 = vadd.f32 %v2290, %v2291
        %v2293 = vrot.slane %v2292, 1
        %v2294 = vadd.f32 %v2292, %v2293
        %v2295 = vadd.f32 %v2231, %v2239
        %v2296 = vadd.f32 %v2295, %v2247
        %v2297 = vadd.f32 %v2296, %v2255
        %v2298 = vrot.slane %v2297, 4
        %v2299 = vadd.f32 %v2297, %v2298
        %v2300 = vrot.slane %v2299, 2
        %v2301 = vadd.f32 %v2299, %v2300
        %v2302 = vrot.slane %v2301, 1
        %v2303 = vadd.f32 %v2301, %v2302
        %v2304 = vadd.f32 %v2232, %v2240
        %v2305 = vadd.f32 %v2304, %v2248
        %v2306 = vadd.f32 %v2305, %v2256
        %v2307 = vrot.slane %v2306, 4
        %v2308 = vadd.f32 %v2306, %v2307
        %v2309 = vrot.slane %v2308, 2
        %v2310 = vadd.f32 %v2308, %v2309
        %v2311 = vrot.slane %v2310, 1
        %v2312 = vadd.f32 %v2310, %v2311
        %v2313 = vadd.f32 %v2233, %v2241
        %v2314 = vadd.f32 %v2313, %v2249
        %v2315 = vadd.f32 %v2314, %v2257
        %v2316 = vrot.slane %v2315, 4
        %v2317 = vadd.f32 %v2315, %v2316
        %v2318 = vrot.slane %v2317, 2
        %v2319 = vadd.f32 %v2317, %v2318
        %v2320 = vrot.slane %v2319, 1
        %v2321 = vadd.f32 %v2319, %v2320
        %v2322 = vadd.f32 %v2234, %v2242
        %v2323 = vadd.f32 %v2322, %v2250
        %v2324 = vadd.f32 %v2323, %v2258
        %v2325 = vrot.slane %v2324, 4
        %v2326 = vadd.f32 %v2324, %v2325
        %v2327 = vrot.slane %v2326, 2
        %v2328 = vadd.f32 %v2326, %v2327
        %v2329 = vrot.slane %v2328, 1
        %v2330 = vadd.f32 %v2328, %v2329
        %v2331 = vstv %s1825
        %v2332 = vadd.f32 %v2267, %v2331
        %v2333 = vadd.f32 %v2276, %v2331
        %v2334 = vadd.f32 %v2285, %v2331
        %v2335 = vadd.f32 %v2294, %v2331
        %v2336 = vadd.f32 %v2303, %v2331
        %v2337 = vadd.f32 %v2312, %v2331
        %v2338 = vadd.f32 %v2321, %v2331
        %v2339 = vadd.f32 %v2330, %v2331
        %v2348 = vcombine.low %v2332, %v2333
        %v2349 = vcombine.low %v2334, %v2335
        %v2350 = vcombine.low %v2336, %v2337
        %v2351 = vcombine.low %v2338, %v2339
        %v2353 = vunpack.c.l.s4 1966171168
        %v2354 = vunpack.c.0.s8 %v2353
        %v2355 = vlaneseq
        %v2356 = vshrl.u32 %v2355, 7
        %v2357 = vsub.s32 %v2354, %v2356
        %v2358 = vrot.slane %v2348, %v2357
        %v2360 = vunpack.c.l.s4 1966171168
        %v2361 = vunpack.c.0.s8 %v2360
        %v2362 = vlaneseq
        %v2363 = vshrl.u32 %v2362, 7
        %v2364 = vsub.s32 %v2361, %v2363
        %v2365 = vrot.slane %v2349, %v2364
        %v2367 = vunpack.c.l.s4 1966171168
        %v2368 = vunpack.c.0.s8 %v2367
        %v2369 = vlaneseq
        %v2370 = vshrl.u32 %v2369, 7
        %v2371 = vsub.s32 %v2368, %v2370
        %v2372 = vrot.slane %v2350, %v2371
        %v2374 = vunpack.c.l.s4 1966171168
        %v2375 = vunpack.c.0.s8 %v2374
        %v2376 = vlaneseq
        %v2377 = vshrl.u32 %v2376, 7
        %v2378 = vsub.s32 %v2375, %v2377
        %v2379 = vrot.slane %v2351, %v2378
        %v2380 = vcombine.low %v2358, %v2365
        %v2381 = vcombine.low %v2372, %v2379
        %v2383 = vunpack.c.l.s4 1966171168
        %v2384 = vunpack.c.0.s8 %v2383
        %v2385 = vlaneseq
        %v2386 = vshrl.u32 %v2385, 7
        %v2387 = vsub.s32 %v2384, %v2386
        %v2388 = vrot.slane %v2380, %v2387
        %v2390 = vunpack.c.l.s4 1966171168
        %v2391 = vunpack.c.0.s8 %v2390
        %v2392 = vlaneseq
        %v2393 = vshrl.u32 %v2392, 7
        %v2394 = vsub.s32 %v2391, %v2393
        %v2395 = vrot.slane %v2381, %v2394
        %v2396 = vcombine.low %v2388, %v2395
        %2398 = vst [vmem:[%s421] sm:$0xff] %v2396
        %s2399 = sand.u32 %s280, 1
        %s2400 = scalar_lea.sflag [#allocation4], %s2399
        %s2401 = sand.u32 %s280, 1
        %s2402 = smul.addr %s2401, 8
        %s2403 = scalar_lea.vmem [#allocation3], %s2402
        // Predicated region
        $region65: #{score_predictor_forward.1} parent=63 // pred_check
          %p2404 = pneg %p290
        $region66: #{score_predictor_forward.1} parent=63 // pred_check_branch
          %2406 = sbr.rel (%p2404) target = $region68
        $region67: #{score_predictor_forward.1} parent=63 // pred_region
          %s2407 = smul.u32 8, %s26
          %s2409 = ssub.s32 128, 128
          %2410 = vsyncadd %s2400, %s2409
          %s2411 = smul.addr %s2407, 16
          %s2412 = scalar_lea.hbm %s11, %s2411
          %s2414 = sshll.u32 %s2403, 4
          %s2415 = int_to_ptr.vmem [resolvable:$true] %s2414
          %2417 = dma.vmem_to_hbm [thread:$0]  %s2415, 128, %s2412, %s2400
        $region68: #{score_predictor_forward.1} parent=63 // pred_fallthru
          _
      $region64: #{score_predictor_forward.1} parent=5 // pred_fallthru
        _
      %p2418 = scmp.le.s32.totalorder 2, %s21
      // Predicated region
      $region69: #{score_predictor_forward.1} parent=5 // pred_check
        %p2419 = pneg %p2418
      $region70: #{score_predictor_forward.1} parent=5 // pred_check_branch
        %2421 = sbr.rel (%p2419) target = $region72
      $region71: #{score_predictor_forward.1} parent=5 // pred_region
        %s2422 = ssub.s32 %s21, 2
        // Predicated region
        $region73: #{score_predictor_forward.1} parent=71 // pred_check
          %p2423 = pneg %p296
        $region74: #{score_predictor_forward.1} parent=71 // pred_check_branch
          %2425 = sbr.rel (%p2423) target = $region76
        $region75: #{score_predictor_forward.1} parent=71 // pred_region
          %s2426 = sand.u32 %s281, 1
          %s2427 = scalar_lea.sflag [#allocation4], %s2426
          %s2428 = sand.u32 %s281, 1
          %s2429 = smul.addr %s2428, 8
          %s2430 = scalar_lea.vmem [#allocation3], %s2429
          %2431 = dma.done %s2427, 128
        $region76: #{score_predictor_forward.1} parent=71 // pred_fallthru
          _
      $region72: #{score_predictor_forward.1} parent=5 // pred_fallthru
        _
    $region6: #{score_predictor_forward.1} parent=1 // loop_footer
      %s25 = sadd.s32 1, %s21
    $region7: #{score_predictor_forward.1} parent=1 // loop_footer_branch
      %20 = sbr.rel target = $region3
    $region8: #{score_predictor_forward.1} parent=1 // loop_exit
      _
    %2432 = vsyncpa [#allocation4], 1
    %s2433 = scalar_lea.sflag [#allocation4], 1
    %2434 = vsyncpa %s2433, 1

</llo_original>
